<compile_context>
chip_gen: v5e
topology: v5e:2x2
jax: 0.10.0
libtpu: 0.0.40
codegen_flags: <defaults>
</compile_context>

<pallas_src>
import functools

import jax
import jax.numpy as jnp
from jax import lax
from jax.experimental import pallas as pl
from jax.experimental.pallas import tpu as pltpu

CONFIG = [(32, 3, True), (64, 3, True), (128, 3, False), (64, 1, False),
          (128, 3, True), (256, 3, False), (128, 1, False), (256, 3, True),
          (512, 3, False), (256, 1, False), (512, 3, False), (256, 1, False),
          (512, 3, True), (1024, 3, False), (512, 1, False), (1024, 3, False),
          (512, 1, False), (1024, 3, False)]

BN_EPS = 1e-5
LEAKY_SLOPE = 0.1                      # Darknet's standard LeakyReLU slope
VMEM_LIMIT_BYTES = 48 * 1024 * 1024    # > v5e 16MiB default, < v7x 64MiB physical


def _pick_tile(n, cap, align):
    """Largest divisor of n that is <= cap and a multiple of `align`.
    Returns n itself when n <= cap (a full-extent block is always legal),
    and None when no aligned divisor exists (caller must pad)."""
    if n <= cap:
        return n
    for d in range(cap, 0, -1):
        if n % d == 0 and d % align == 0:
            return d
    return None


# ---------------------------------------------------------------------------
# Fused 1x1-conv (matmul) + folded-BN + LeakyReLU kernel.
# Grid is 1-D over M; the weight / scale / bias blocks are grid-invariant
# (fetched once).  No reduction grid axis, no scratch accumulator.
# ---------------------------------------------------------------------------
def _conv1x1_kernel(a_ref, w_ref, s_ref, c_ref, o_ref):
    acc = jnp.dot(a_ref[...], w_ref[...], preferred_element_type=jnp.float32)
    y = acc * s_ref[...] + c_ref[...]          # folded BatchNorm
    o_ref[...] = jnp.maximum(y, LEAKY_SLOPE * y).astype(o_ref.dtype)


def conv1x1_bn_leaky(x, w, scale, bias, out_dtype):
    """x: (N, H, W, Cin); w: (1, 1, Cin, Cout) -> (N, H, W, Cout)."""
    N, H, W, Cin = x.shape
    Cout = w.shape[-1]
    M = N * H * W
    a = x.reshape(M, Cin)                      # free row-major reshape

    tm = _pick_tile(M, 1024, 8)
    if tm is None:                             # awkward M: pad rows
        tm = 1024
        a = jnp.pad(a, ((0, (-M) % tm), (0, 0)))
    Mp = a.shape[0]

    out = pl.pallas_call(
        _conv1x1_kernel,
        out_shape=jax.ShapeDtypeStruct((Mp, Cout), out_dtype),
        grid_spec=pltpu.PrefetchScalarGridSpec(
            num_scalar_prefetch=0,
            grid=(Mp // tm,),
            in_specs=[
                pl.BlockSpec((tm, Cin), lambda i: (i, 0)),
                pl.BlockSpec((Cin, Cout), lambda i: (0, 0)),   # grid-invariant
                pl.BlockSpec((1, Cout), lambda i: (0, 0)),
                pl.BlockSpec((1, Cout), lambda i: (0, 0)),
            ],
            out_specs=pl.BlockSpec((tm, Cout), lambda i: (i, 0))),
        compiler_params=pltpu.CompilerParams(
            dimension_semantics=("parallel",),
            vmem_limit_bytes=VMEM_LIMIT_BYTES),
    )(a, w.reshape(Cin, Cout), scale.reshape(1, Cout), bias.reshape(1, Cout))
    if Mp != M:
        out = out[:M]
    return out.reshape(N, H, W, Cout)


# ---------------------------------------------------------------------------
# Fused direct 3x3-conv + folded-BN + LeakyReLU (+ optional fused 2x2 maxpool).
# Grid: 1-D over Cout tiles.  The input block is grid-invariant, so the padded
# input and the 9 tap LHS matrices are built ONCE (j == 0) into VMEM scratch
# and reused for every Cout tile; each grid step is then 9 MXU dots + epilogue.
# ---------------------------------------------------------------------------
def _conv3x3_kernel(pool, x_ref, w_ref, s_ref, c_ref, o_ref, xpad_ref, lhs_ref):
    N, H, W, Cin = x_ref.shape
    tn = o_ref.shape[-1]
    M = N * H * W

    @pl.when(pl.program_id(0) == 0)
    def _():
        # Zero-pad the input (1-pixel border) entirely in VMEM -- no HBM pad
        # pass -- then cache the 9 shifted tap matrices (done once per layer).
        xpad_ref[...] = jnp.zeros_like(xpad_ref)
        xpad_ref[:, 1:H + 1, 1:W + 1, :] = x_ref[...]
        for kh in range(3):
            for kw in range(3):
                tap = xpad_ref[:, kh:kh + H, kw:kw + W, :]
                lhs_ref[kh * 3 + kw] = tap.reshape(M, Cin)

    acc = jnp.zeros((M, tn), jnp.float32)
    for t in range(9):
        acc = acc + jnp.dot(lhs_ref[t], w_ref[t],
                            preferred_element_type=jnp.float32)
    y = acc * s_ref[...] + c_ref[...]          # folded BatchNorm
    y = jnp.maximum(y, LEAKY_SLOPE * y)        # LeakyReLU (slope < 1)

    if pool:                                   # fused 2x2/stride-2 max-pool
        Ho, Wo = H // 2, W // 2
        y = y.reshape(N, Ho, 2, Wo, 2, tn)
        y = jnp.maximum(jnp.maximum(y[:, :, 0, :, 0, :], y[:, :, 0, :, 1, :]),
                        jnp.maximum(y[:, :, 1, :, 0, :], y[:, :, 1, :, 1, :]))
        o_ref[...] = y.astype(o_ref.dtype)
    else:
        o_ref[...] = y.reshape(N, H, W, tn).astype(o_ref.dtype)


def conv3x3_bn_leaky(x, w, scale, bias, out_dtype, pool):
    """x: (N, H, W, Cin); w: (3, 3, Cin, Cout) -> (N, Ho, Wo, Cout)."""
    N, H, W, Cin = x.shape
    Cout = w.shape[-1]
    Ho, Wo = (H // 2, W // 2) if pool else (H, W)
    M = N * H * W
    tn = Cout if Cout <= 512 else 512          # Cout is always 32 * 2^k here
    w9 = w.reshape(9, Cin, Cout)               # free row-major reshape

    kernel = functools.partial(_conv3x3_kernel, pool)
    return pl.pallas_call(
        kernel,
        out_shape=jax.ShapeDtypeStruct((N, Ho, Wo, Cout), out_dtype),
        grid_spec=pltpu.PrefetchScalarGridSpec(
            num_scalar_prefetch=0,
            grid=(Cout // tn,),
            in_specs=[
                pl.BlockSpec((N, H, W, Cin), lambda j: (0, 0, 0, 0)),   # invariant
                pl.BlockSpec((9, Cin, tn), lambda j: (0, 0, j)),
                pl.BlockSpec((1, tn), lambda j: (0, j)),
                pl.BlockSpec((1, tn), lambda j: (0, j)),
            ],
            out_specs=pl.BlockSpec((N, Ho, Wo, tn), lambda j: (0, 0, 0, j)),
            scratch_shapes=[
                pltpu.VMEM((N, H + 2, W + 2, Cin), x.dtype),   # padded input
                pltpu.VMEM((9, M, Cin), x.dtype),              # 9 tap LHS mats
            ]),
        compiler_params=pltpu.CompilerParams(
            # "arbitrary": the j==0 scratch build must run before later tiles.
            dimension_semantics=("arbitrary",),
            vmem_limit_bytes=VMEM_LIMIT_BYTES),
    )(x, w9, scale.reshape(1, Cout), bias.reshape(1, Cout))


# ---------------------------------------------------------------------------
# Parameter init (deterministic, in-script). Conv weights are stored bf16
# (MXU operand dtype); folded-BN scale/bias stay f32 for the epilogue.
# ---------------------------------------------------------------------------
def init_params(key):
    params = []
    in_c = 3
    for out_c, k, mp in CONFIG:
        assert not (mp and k == 1), "max-pool is only fused into 3x3 layers"
        key, kw, kg, kb, km, kv = jax.random.split(key, 6)
        fan_in = k * k * in_c
        w = (jax.random.normal(kw, (k, k, in_c, out_c), jnp.float32)
             * (2.0 / fan_in) ** 0.5).astype(jnp.bfloat16)
        gamma = 1.0 + 0.1 * jax.random.normal(kg, (out_c,), jnp.float32)
        beta = 0.1 * jax.random.normal(kb, (out_c,), jnp.float32)
        mean = 0.1 * jax.random.normal(km, (out_c,), jnp.float32)
        var = 1.0 + 0.1 * jax.random.uniform(kv, (out_c,), jnp.float32)
        scale = gamma / jnp.sqrt(var + BN_EPS)          # fold BN into affine
        bias = beta - mean * scale
        params.append(dict(w=w, scale=scale, bias=bias, k=k, pool=mp))
        in_c = out_c
    return params


def darknet19_forward(x_nchw, params):
    x = jnp.transpose(x_nchw, (0, 2, 3, 1)).astype(jnp.bfloat16)   # NCHW -> NHWC
    for idx, p in enumerate(params):
        last = idx == len(params) - 1
        out_dtype = jnp.float32 if last else jnp.bfloat16
        if p["k"] == 1:
            x = conv1x1_bn_leaky(x, p["w"], p["scale"], p["bias"], out_dtype)
        else:
            x = conv3x3_bn_leaky(x, p["w"], p["scale"], p["bias"], out_dtype,
                                 pool=p["pool"])
    return jnp.transpose(x, (0, 3, 1, 2))                          # NHWC -> NCHW


# Pure-JAX reference (mirrors the bf16 operand / bf16 inter-layer quantization
# so the comparison isolates kernel correctness, not dtype choice).
def darknet19_reference(x_nchw, params):
    x = jnp.transpose(x_nchw, (0, 2, 3, 1)).astype(jnp.bfloat16)
    for idx, p in enumerate(params):
        last = idx == len(params) - 1
        k = p["k"]
        y = lax.conv_general_dilated(
            x.astype(jnp.float32), p["w"].astype(jnp.float32),
            window_strides=(1, 1), padding=[(k // 2, k // 2)] * 2,
            dimension_numbers=("NHWC", "HWIO", "NHWC"))
        y = y * p["scale"] + p["bias"]
        y = jnp.maximum(y, LEAKY_SLOPE * y)
        if p["pool"]:
            y = lax.reduce_window(y, jnp.array(-jnp.inf, y.dtype), lax.max,
                                  (1, 2, 2, 1), (1, 2, 2, 1), "VALID")
        x = y.astype(jnp.float32 if last else jnp.bfloat16)
    return jnp.transpose(x, (0, 3, 1, 2))


def _selftest_conv3x3():
    """Tight-tolerance f32 check of the padding / tap / fused-pool logic."""
    key = jax.random.PRNGKey(1)
    k1, k2 = jax.random.split(key)
    x = jax.random.normal(k1, (2, 8, 8, 16), jnp.float32)
    w = jax.random.normal(k2, (3, 3, 16, 32), jnp.float32) * 0.1
    scale = jnp.linspace(0.5, 1.5, 32, dtype=jnp.float32)
    bias = jnp.linspace(-0.2, 0.2, 32, dtype=jnp.float32)
    for pool in (False, True):
        got = jax.block_until_ready(
            conv3x3_bn_leaky(x, w, scale, bias, jnp.float32, pool))
        ref = lax.conv_general_dilated(
            x, w, (1, 1), [(1, 1), (1, 1)],
            dimension_numbers=("NHWC", "HWIO", "NHWC"))
        ref = ref * scale + bias
        ref = jnp.maximum(ref, LEAKY_SLOPE * ref)
        if pool:
            ref = lax.reduce_window(ref, jnp.array(-jnp.inf, ref.dtype), lax.max,
                                    (1, 2, 2, 1), (1, 2, 2, 1), "VALID")
        err = float(jnp.max(jnp.abs(got - ref)))
        assert err < 1e-3, f"conv3x3 selftest (pool={pool}) error {err}"


if __name__ == "__main__":
    _selftest_conv3x3()

    key = jax.random.PRNGKey(0)
    kx, kp = jax.random.split(key)
    # Small input consistent with the module: NCHW, 3 input channels,
    # 32x32 spatial (5 max-pools -> 1x1 output, 1024 channels).
    x = jax.random.normal(kx, (2, 3, 32, 32), jnp.float32)
    params = init_params(kp)

    out = jax.block_until_ready(darknet19_forward(x, params))
    assert out.shape == (2, 1024, 1, 1), out.shape

    ref = jax.block_until_ready(darknet19_reference(x, params))
    rel_err = float(jnp.max(jnp.abs(out - ref)) / (jnp.max(jnp.abs(ref)) + 1e-6))
    assert rel_err < 5e-2, f"relative error too large: {rel_err}"

    print("KERNEL_OK")
</pallas_src>

<mosaic_0001>
module attributes {stable_mosaic.version = 11 : i64} {
  func.func @_conv3x3_kernel(%arg0: i32, %arg1: memref<2x8x8x16xf32, #tpu.memory_space<vmem>>, %arg2: memref<9x16x32xf32, #tpu.memory_space<vmem>>, %arg3: memref<1x32xf32, #tpu.memory_space<vmem>>, %arg4: memref<1x32xf32, #tpu.memory_space<vmem>>, %arg5: memref<2x8x8x32xf32, #tpu.memory_space<vmem>>, %arg6: memref<2x10x10x16xf32, #tpu.memory_space<vmem>>, %arg7: memref<9x128x16xf32, #tpu.memory_space<vmem>>) attributes {dimension_semantics = [#tpu.dimension_semantics<arbitrary>], iteration_bounds = array<i64: 1>, scalar_prefetch = 0 : i64, scratch_operands = 2 : i64, tpu.core_type = #tpu.core_type<tc>, window_params = [{pipeline_mode = #tpu.pipeline_mode<synchronous>, transform_indices = @transform_0, window_bounds = array<i64: 2, 8, 8, 16>}, {transform_indices = @transform_1, window_bounds = array<i64: 9, 16, 32>}, {transform_indices = @transform_2, window_bounds = array<i64: 1, 32>}, {transform_indices = @transform_3, window_bounds = array<i64: 1, 32>}, {transform_indices = @transform_4, window_bounds = array<i64: 2, 8, 8, 32>}]} {
    %c0_i32 = arith.constant 0 : i32
    %0 = arith.cmpi eq, %arg0, %c0_i32 : i32
    %1 = arith.extui %0 : i1 to i32
    %c0_i32_0 = arith.constant 0 : i32
    %2 = arith.cmpi ne, %1, %c0_i32_0 : i32
    scf.if %2 {
      %cst_64 = arith.constant 0.000000e+00 : f32
      %69 = vector.broadcast %cst_64 : f32 to vector<2x10x10x16xf32>
      %c0_65 = arith.constant 0 : index
      %c0_66 = arith.constant 0 : index
      %c0_67 = arith.constant 0 : index
      %c0_68 = arith.constant 0 : index
      %70 = vector.load %arg6[%c0_65, %c0_66, %c0_67, %c0_68] : memref<2x10x10x16xf32, #tpu.memory_space<vmem>>, vector<2x10x10x16xf32>
      tpu.vector_store %arg6[%c0_65, %c0_66, %c0_67, %c0_68], %69 {strides = array<i32>} : memref<2x10x10x16xf32, #tpu.memory_space<vmem>>, vector<2x10x10x16xf32>,
      %c0_69 = arith.constant 0 : index
      %c0_70 = arith.constant 0 : index
      %c0_71 = arith.constant 0 : index
      %c0_72 = arith.constant 0 : index
      %71 = vector.load %arg1[%c0_69, %c0_70, %c0_71, %c0_72] : memref<2x8x8x16xf32, #tpu.memory_space<vmem>>, vector<2x8x8x16xf32>
      %c0_73 = arith.constant 0 : index
      %c1_74 = arith.constant 1 : index
      %c1_75 = arith.constant 1 : index
      %c0_76 = arith.constant 0 : index
      %72 = vector.load %arg6[%c0_73, %c1_74, %c1_75, %c0_76] : memref<2x10x10x16xf32, #tpu.memory_space<vmem>>, vector<2x8x8x16xf32>
      tpu.vector_store %arg6[%c0_73, %c1_74, %c1_75, %c0_76], %71 {strides = array<i32>} : memref<2x10x10x16xf32, #tpu.memory_space<vmem>>, vector<2x8x8x16xf32>,
      %c0_77 = arith.constant 0 : index
      %c0_78 = arith.constant 0 : index
      %c0_79 = arith.constant 0 : index
      %c0_80 = arith.constant 0 : index
      %73 = vector.load %arg6[%c0_77, %c0_78, %c0_79, %c0_80] : memref<2x10x10x16xf32, #tpu.memory_space<vmem>>, vector<2x8x8x16xf32>
      %74 = vector.shape_cast %73 : vector<2x8x8x16xf32> to vector<128x16xf32>
      %c0_81 = arith.constant 0 : index
      %c0_82 = arith.constant 0 : index
      %c0_83 = arith.constant 0 : index
      %75 = vector.load %arg7[%c0_81, %c0_82, %c0_83] : memref<9x128x16xf32, #tpu.memory_space<vmem>>, vector<1x128x16xf32>
      %76 = vector.shape_cast %75 : vector<1x128x16xf32> to vector<128x16xf32>
      %77 = vector.shape_cast %74 : vector<128x16xf32> to vector<1x128x16xf32>
      tpu.vector_store %arg7[%c0_81, %c0_82, %c0_83], %77 {strides = array<i32>} : memref<9x128x16xf32, #tpu.memory_space<vmem>>, vector<1x128x16xf32>,
      %c0_84 = arith.constant 0 : index
      %c0_85 = arith.constant 0 : index
      %c1_86 = arith.constant 1 : index
      %c0_87 = arith.constant 0 : index
      %78 = vector.load %arg6[%c0_84, %c0_85, %c1_86, %c0_87] : memref<2x10x10x16xf32, #tpu.memory_space<vmem>>, vector<2x8x8x16xf32>
      %79 = vector.shape_cast %78 : vector<2x8x8x16xf32> to vector<128x16xf32>
      %c1_88 = arith.constant 1 : index
      %c0_89 = arith.constant 0 : index
      %c0_90 = arith.constant 0 : index
      %80 = vector.load %arg7[%c1_88, %c0_89, %c0_90] : memref<9x128x16xf32, #tpu.memory_space<vmem>>, vector<1x128x16xf32>
      %81 = vector.shape_cast %80 : vector<1x128x16xf32> to vector<128x16xf32>
      %82 = vector.shape_cast %79 : vector<128x16xf32> to vector<1x128x16xf32>
      tpu.vector_store %arg7[%c1_88, %c0_89, %c0_90], %82 {strides = array<i32>} : memref<9x128x16xf32, #tpu.memory_space<vmem>>, vector<1x128x16xf32>,
      %c0_91 = arith.constant 0 : index
      %c0_92 = arith.constant 0 : index
      %c2_93 = arith.constant 2 : index
      %c0_94 = arith.constant 0 : index
      %83 = vector.load %arg6[%c0_91, %c0_92, %c2_93, %c0_94] : memref<2x10x10x16xf32, #tpu.memory_space<vmem>>, vector<2x8x8x16xf32>
      %84 = vector.shape_cast %83 : vector<2x8x8x16xf32> to vector<128x16xf32>
      %c2_95 = arith.constant 2 : index
      %c0_96 = arith.constant 0 : index
      %c0_97 = arith.constant 0 : index
      %85 = vector.load %arg7[%c2_95, %c0_96, %c0_97] : memref<9x128x16xf32, #tpu.memory_space<vmem>>, vector<1x128x16xf32>
      %86 = vector.shape_cast %85 : vector<1x128x16xf32> to vector<128x16xf32>
      %87 = vector.shape_cast %84 : vector<128x16xf32> to vector<1x128x16xf32>
      tpu.vector_store %arg7[%c2_95, %c0_96, %c0_97], %87 {strides = array<i32>} : memref<9x128x16xf32, #tpu.memory_space<vmem>>, vector<1x128x16xf32>,
      %c0_98 = arith.constant 0 : index
      %c1_99 = arith.constant 1 : index
      %c0_100 = arith.constant 0 : index
      %c0_101 = arith.constant 0 : index
      %88 = vector.load %arg6[%c0_98, %c1_99, %c0_100, %c0_101] : memref<2x10x10x16xf32, #tpu.memory_space<vmem>>, vector<2x8x8x16xf32>
      %89 = vector.shape_cast %88 : vector<2x8x8x16xf32> to vector<128x16xf32>
      %c3_102 = arith.constant 3 : index
      %c0_103 = arith.constant 0 : index
      %c0_104 = arith.constant 0 : index
      %90 = vector.load %arg7[%c3_102, %c0_103, %c0_104] : memref<9x128x16xf32, #tpu.memory_space<vmem>>, vector<1x128x16xf32>
      %91 = vector.shape_cast %90 : vector<1x128x16xf32> to vector<128x16xf32>
      %92 = vector.shape_cast %89 : vector<128x16xf32> to vector<1x128x16xf32>
      tpu.vector_store %arg7[%c3_102, %c0_103, %c0_104], %92 {strides = array<i32>} : memref<9x128x16xf32, #tpu.memory_space<vmem>>, vector<1x128x16xf32>,
      %c0_105 = arith.constant 0 : index
      %c1_106 = arith.constant 1 : index
      %c1_107 = arith.constant 1 : index
      %c0_108 = arith.constant 0 : index
      %93 = vector.load %arg6[%c0_105, %c1_106, %c1_107, %c0_108] : memref<2x10x10x16xf32, #tpu.memory_space<vmem>>, vector<2x8x8x16xf32>
      %94 = vector.shape_cast %93 : vector<2x8x8x16xf32> to vector<128x16xf32>
      %c4_109 = arith.constant 4 : index
      %c0_110 = arith.constant 0 : index
      %c0_111 = arith.constant 0 : index
      %95 = vector.load %arg7[%c4_109, %c0_110, %c0_111] : memref<9x128x16xf32, #tpu.memory_space<vmem>>, vector<1x128x16xf32>
      %96 = vector.shape_cast %95 : vector<1x128x16xf32> to vector<128x16xf32>
      %97 = vector.shape_cast %94 : vector<128x16xf32> to vector<1x128x16xf32>
      tpu.vector_store %arg7[%c4_109, %c0_110, %c0_111], %97 {strides = array<i32>} : memref<9x128x16xf32, #tpu.memory_space<vmem>>, vector<1x128x16xf32>,
      %c0_112 = arith.constant 0 : index
      %c1_113 = arith.constant 1 : index
      %c2_114 = arith.constant 2 : index
      %c0_115 = arith.constant 0 : index
      %98 = vector.load %arg6[%c0_112, %c1_113, %c2_114, %c0_115] : memref<2x10x10x16xf32, #tpu.memory_space<vmem>>, vector<2x8x8x16xf32>
      %99 = vector.shape_cast %98 : vector<2x8x8x16xf32> to vector<128x16xf32>
      %c5_116 = arith.constant 5 : index
      %c0_117 = arith.constant 0 : index
      %c0_118 = arith.constant 0 : index
      %100 = vector.load %arg7[%c5_116, %c0_117, %c0_118] : memref<9x128x16xf32, #tpu.memory_space<vmem>>, vector<1x128x16xf32>
      %101 = vector.shape_cast %100 : vector<1x128x16xf32> to vector<128x16xf32>
      %102 = vector.shape_cast %99 : vector<128x16xf32> to vector<1x128x16xf32>
      tpu.vector_store %arg7[%c5_116, %c0_117, %c0_118], %102 {strides = array<i32>} : memref<9x128x16xf32, #tpu.memory_space<vmem>>, vector<1x128x16xf32>,
      %c0_119 = arith.constant 0 : index
      %c2_120 = arith.constant 2 : index
      %c0_121 = arith.constant 0 : index
      %c0_122 = arith.constant 0 : index
      %103 = vector.load %arg6[%c0_119, %c2_120, %c0_121, %c0_122] : memref<2x10x10x16xf32, #tpu.memory_space<vmem>>, vector<2x8x8x16xf32>
      %104 = vector.shape_cast %103 : vector<2x8x8x16xf32> to vector<128x16xf32>
      %c6_123 = arith.constant 6 : index
      %c0_124 = arith.constant 0 : index
      %c0_125 = arith.constant 0 : index
      %105 = vector.load %arg7[%c6_123, %c0_124, %c0_125] : memref<9x128x16xf32, #tpu.memory_space<vmem>>, vector<1x128x16xf32>
      %106 = vector.shape_cast %105 : vector<1x128x16xf32> to vector<128x16xf32>
      %107 = vector.shape_cast %104 : vector<128x16xf32> to vector<1x128x16xf32>
      tpu.vector_store %arg7[%c6_123, %c0_124, %c0_125], %107 {strides = array<i32>} : memref<9x128x16xf32, #tpu.memory_space<vmem>>, vector<1x128x16xf32>,
      %c0_126 = arith.constant 0 : index
      %c2_127 = arith.constant 2 : index
      %c1_128 = arith.constant 1 : index
      %c0_129 = arith.constant 0 : index
      %108 = vector.load %arg6[%c0_126, %c2_127, %c1_128, %c0_129] : memref<2x10x10x16xf32, #tpu.memory_space<vmem>>, vector<2x8x8x16xf32>
      %109 = vector.shape_cast %108 : vector<2x8x8x16xf32> to vector<128x16xf32>
      %c7_130 = arith.constant 7 : index
      %c0_131 = arith.constant 0 : index
      %c0_132 = arith.constant 0 : index
      %110 = vector.load %arg7[%c7_130, %c0_131, %c0_132] : memref<9x128x16xf32, #tpu.memory_space<vmem>>, vector<1x128x16xf32>
      %111 = vector.shape_cast %110 : vector<1x128x16xf32> to vector<128x16xf32>
      %112 = vector.shape_cast %109 : vector<128x16xf32> to vector<1x128x16xf32>
      tpu.vector_store %arg7[%c7_130, %c0_131, %c0_132], %112 {strides = array<i32>} : memref<9x128x16xf32, #tpu.memory_space<vmem>>, vector<1x128x16xf32>,
      %c0_133 = arith.constant 0 : index
      %c2_134 = arith.constant 2 : index
      %c2_135 = arith.constant 2 : index
      %c0_136 = arith.constant 0 : index
      %113 = vector.load %arg6[%c0_133, %c2_134, %c2_135, %c0_136] : memref<2x10x10x16xf32, #tpu.memory_space<vmem>>, vector<2x8x8x16xf32>
      %114 = vector.shape_cast %113 : vector<2x8x8x16xf32> to vector<128x16xf32>
      %c8_137 = arith.constant 8 : index
      %c0_138 = arith.constant 0 : index
      %c0_139 = arith.constant 0 : index
      %115 = vector.load %arg7[%c8_137, %c0_138, %c0_139] : memref<9x128x16xf32, #tpu.memory_space<vmem>>, vector<1x128x16xf32>
      %116 = vector.shape_cast %115 : vector<1x128x16xf32> to vector<128x16xf32>
      %117 = vector.shape_cast %114 : vector<128x16xf32> to vector<1x128x16xf32>
      tpu.vector_store %arg7[%c8_137, %c0_138, %c0_139], %117 {strides = array<i32>} : memref<9x128x16xf32, #tpu.memory_space<vmem>>, vector<1x128x16xf32>,
    } else {
    }
    %cst = arith.constant 0.000000e+00 : f32
    %3 = vector.broadcast %cst : f32 to vector<128x32xf32>
    %c0 = arith.constant 0 : index
    %c0_1 = arith.constant 0 : index
    %c0_2 = arith.constant 0 : index
    %4 = vector.load %arg7[%c0, %c0_1, %c0_2] : memref<9x128x16xf32, #tpu.memory_space<vmem>>, vector<1x128x16xf32>
    %5 = vector.shape_cast %4 : vector<1x128x16xf32> to vector<128x16xf32>
    %c0_3 = arith.constant 0 : index
    %c0_4 = arith.constant 0 : index
    %c0_5 = arith.constant 0 : index
    %6 = vector.load %arg2[%c0_3, %c0_4, %c0_5] : memref<9x16x32xf32, #tpu.memory_space<vmem>>, vector<1x16x32xf32>
    %7 = vector.shape_cast %6 : vector<1x16x32xf32> to vector<16x32xf32>
    %cst_6 = arith.constant dense<0.000000e+00> : vector<128x32xf32>
    %8 = tpu.matmul %5, %7, %cst_6 {dimension_numbers = #tpu.dot_dimension_numbers<[1], [0], [0], [1], [0, 0, 1, 1], [], []>} : vector<128x16xf32>, vector<16x32xf32>, vector<128x32xf32> -> vector<128x32xf32>
    %9 = arith.addf %3, %8 : vector<128x32xf32>
    %c1 = arith.constant 1 : index
    %c0_7 = arith.constant 0 : index
    %c0_8 = arith.constant 0 : index
    %10 = vector.load %arg7[%c1, %c0_7, %c0_8] : memref<9x128x16xf32, #tpu.memory_space<vmem>>, vector<1x128x16xf32>
    %11 = vector.shape_cast %10 : vector<1x128x16xf32> to vector<128x16xf32>
    %c1_9 = arith.constant 1 : index
    %c0_10 = arith.constant 0 : index
    %c0_11 = arith.constant 0 : index
    %12 = vector.load %arg2[%c1_9, %c0_10, %c0_11] : memref<9x16x32xf32, #tpu.memory_space<vmem>>, vector<1x16x32xf32>
    %13 = vector.shape_cast %12 : vector<1x16x32xf32> to vector<16x32xf32>
    %cst_12 = arith.constant dense<0.000000e+00> : vector<128x32xf32>
    %14 = tpu.matmul %11, %13, %cst_12 {dimension_numbers = #tpu.dot_dimension_numbers<[1], [0], [0], [1], [0, 0, 1, 1], [], []>} : vector<128x16xf32>, vector<16x32xf32>, vector<128x32xf32> -> vector<128x32xf32>
    %15 = arith.addf %9, %14 : vector<128x32xf32>
    %c2 = arith.constant 2 : index
    %c0_13 = arith.constant 0 : index
    %c0_14 = arith.constant 0 : index
    %16 = vector.load %arg7[%c2, %c0_13, %c0_14] : memref<9x128x16xf32, #tpu.memory_space<vmem>>, vector<1x128x16xf32>
    %17 = vector.shape_cast %16 : vector<1x128x16xf32> to vector<128x16xf32>
    %c2_15 = arith.constant 2 : index
    %c0_16 = arith.constant 0 : index
    %c0_17 = arith.constant 0 : index
    %18 = vector.load %arg2[%c2_15, %c0_16, %c0_17] : memref<9x16x32xf32, #tpu.memory_space<vmem>>, vector<1x16x32xf32>
    %19 = vector.shape_cast %18 : vector<1x16x32xf32> to vector<16x32xf32>
    %cst_18 = arith.constant dense<0.000000e+00> : vector<128x32xf32>
    %20 = tpu.matmul %17, %19, %cst_18 {dimension_numbers = #tpu.dot_dimension_numbers<[1], [0], [0], [1], [0, 0, 1, 1], [], []>} : vector<128x16xf32>, vector<16x32xf32>, vector<128x32xf32> -> vector<128x32xf32>
    %21 = arith.addf %15, %20 : vector<128x32xf32>
    %c3 = arith.constant 3 : index
    %c0_19 = arith.constant 0 : index
    %c0_20 = arith.constant 0 : index
    %22 = vector.load %arg7[%c3, %c0_19, %c0_20] : memref<9x128x16xf32, #tpu.memory_space<vmem>>, vector<1x128x16xf32>
    %23 = vector.shape_cast %22 : vector<1x128x16xf32> to vector<128x16xf32>
    %c3_21 = arith.constant 3 : index
    %c0_22 = arith.constant 0 : index
    %c0_23 = arith.constant 0 : index
    %24 = vector.load %arg2[%c3_21, %c0_22, %c0_23] : memref<9x16x32xf32, #tpu.memory_space<vmem>>, vector<1x16x32xf32>
    %25 = vector.shape_cast %24 : vector<1x16x32xf32> to vector<16x32xf32>
    %cst_24 = arith.constant dense<0.000000e+00> : vector<128x32xf32>
    %26 = tpu.matmul %23, %25, %cst_24 {dimension_numbers = #tpu.dot_dimension_numbers<[1], [0], [0], [1], [0, 0, 1, 1], [], []>} : vector<128x16xf32>, vector<16x32xf32>, vector<128x32xf32> -> vector<128x32xf32>
    %27 = arith.addf %21, %26 : vector<128x32xf32>
    %c4 = arith.constant 4 : index
    %c0_25 = arith.constant 0 : index
    %c0_26 = arith.constant 0 : index
    %28 = vector.load %arg7[%c4, %c0_25, %c0_26] : memref<9x128x16xf32, #tpu.memory_space<vmem>>, vector<1x128x16xf32>
    %29 = vector.shape_cast %28 : vector<1x128x16xf32> to vector<128x16xf32>
    %c4_27 = arith.constant 4 : index
    %c0_28 = arith.constant 0 : index
    %c0_29 = arith.constant 0 : index
    %30 = vector.load %arg2[%c4_27, %c0_28, %c0_29] : memref<9x16x32xf32, #tpu.memory_space<vmem>>, vector<1x16x32xf32>
    %31 = vector.shape_cast %30 : vector<1x16x32xf32> to vector<16x32xf32>
    %cst_30 = arith.constant dense<0.000000e+00> : vector<128x32xf32>
    %32 = tpu.matmul %29, %31, %cst_30 {dimension_numbers = #tpu.dot_dimension_numbers<[1], [0], [0], [1], [0, 0, 1, 1], [], []>} : vector<128x16xf32>, vector<16x32xf32>, vector<128x32xf32> -> vector<128x32xf32>
    %33 = arith.addf %27, %32 : vector<128x32xf32>
    %c5 = arith.constant 5 : index
    %c0_31 = arith.constant 0 : index
    %c0_32 = arith.constant 0 : index
    %34 = vector.load %arg7[%c5, %c0_31, %c0_32] : memref<9x128x16xf32, #tpu.memory_space<vmem>>, vector<1x128x16xf32>
    %35 = vector.shape_cast %34 : vector<1x128x16xf32> to vector<128x16xf32>
    %c5_33 = arith.constant 5 : index
    %c0_34 = arith.constant 0 : index
    %c0_35 = arith.constant 0 : index
    %36 = vector.load %arg2[%c5_33, %c0_34, %c0_35] : memref<9x16x32xf32, #tpu.memory_space<vmem>>, vector<1x16x32xf32>
    %37 = vector.shape_cast %36 : vector<1x16x32xf32> to vector<16x32xf32>
    %cst_36 = arith.constant dense<0.000000e+00> : vector<128x32xf32>
    %38 = tpu.matmul %35, %37, %cst_36 {dimension_numbers = #tpu.dot_dimension_numbers<[1], [0], [0], [1], [0, 0, 1, 1], [], []>} : vector<128x16xf32>, vector<16x32xf32>, vector<128x32xf32> -> vector<128x32xf32>
    %39 = arith.addf %33, %38 : vector<128x32xf32>
    %c6 = arith.constant 6 : index
    %c0_37 = arith.constant 0 : index
    %c0_38 = arith.constant 0 : index
    %40 = vector.load %arg7[%c6, %c0_37, %c0_38] : memref<9x128x16xf32, #tpu.memory_space<vmem>>, vector<1x128x16xf32>
    %41 = vector.shape_cast %40 : vector<1x128x16xf32> to vector<128x16xf32>
    %c6_39 = arith.constant 6 : index
    %c0_40 = arith.constant 0 : index
    %c0_41 = arith.constant 0 : index
    %42 = vector.load %arg2[%c6_39, %c0_40, %c0_41] : memref<9x16x32xf32, #tpu.memory_space<vmem>>, vector<1x16x32xf32>
    %43 = vector.shape_cast %42 : vector<1x16x32xf32> to vector<16x32xf32>
    %cst_42 = arith.constant dense<0.000000e+00> : vector<128x32xf32>
    %44 = tpu.matmul %41, %43, %cst_42 {dimension_numbers = #tpu.dot_dimension_numbers<[1], [0], [0], [1], [0, 0, 1, 1], [], []>} : vector<128x16xf32>, vector<16x32xf32>, vector<128x32xf32> -> vector<128x32xf32>
    %45 = arith.addf %39, %44 : vector<128x32xf32>
    %c7 = arith.constant 7 : index
    %c0_43 = arith.constant 0 : index
    %c0_44 = arith.constant 0 : index
    %46 = vector.load %arg7[%c7, %c0_43, %c0_44] : memref<9x128x16xf32, #tpu.memory_space<vmem>>, vector<1x128x16xf32>
    %47 = vector.shape_cast %46 : vector<1x128x16xf32> to vector<128x16xf32>
    %c7_45 = arith.constant 7 : index
    %c0_46 = arith.constant 0 : index
    %c0_47 = arith.constant 0 : index
    %48 = vector.load %arg2[%c7_45, %c0_46, %c0_47] : memref<9x16x32xf32, #tpu.memory_space<vmem>>, vector<1x16x32xf32>
    %49 = vector.shape_cast %48 : vector<1x16x32xf32> to vector<16x32xf32>
    %cst_48 = arith.constant dense<0.000000e+00> : vector<128x32xf32>
    %50 = tpu.matmul %47, %49, %cst_48 {dimension_numbers = #tpu.dot_dimension_numbers<[1], [0], [0], [1], [0, 0, 1, 1], [], []>} : vector<128x16xf32>, vector<16x32xf32>, vector<128x32xf32> -> vector<128x32xf32>
    %51 = arith.addf %45, %50 : vector<128x32xf32>
    %c8 = arith.constant 8 : index
    %c0_49 = arith.constant 0 : index
    %c0_50 = arith.constant 0 : index
    %52 = vector.load %arg7[%c8, %c0_49, %c0_50] : memref<9x128x16xf32, #tpu.memory_space<vmem>>, vector<1x128x16xf32>
    %53 = vector.shape_cast %52 : vector<1x128x16xf32> to vector<128x16xf32>
    %c8_51 = arith.constant 8 : index
    %c0_52 = arith.constant 0 : index
    %c0_53 = arith.constant 0 : index
    %54 = vector.load %arg2[%c8_51, %c0_52, %c0_53] : memref<9x16x32xf32, #tpu.memory_space<vmem>>, vector<1x16x32xf32>
    %55 = vector.shape_cast %54 : vector<1x16x32xf32> to vector<16x32xf32>
    %cst_54 = arith.constant dense<0.000000e+00> : vector<128x32xf32>
    %56 = tpu.matmul %53, %55, %cst_54 {dimension_numbers = #tpu.dot_dimension_numbers<[1], [0], [0], [1], [0, 0, 1, 1], [], []>} : vector<128x16xf32>, vector<16x32xf32>, vector<128x32xf32> -> vector<128x32xf32>
    %57 = arith.addf %51, %56 : vector<128x32xf32>
    %c0_55 = arith.constant 0 : index
    %c0_56 = arith.constant 0 : index
    %58 = vector.load %arg3[%c0_55, %c0_56] : memref<1x32xf32, #tpu.memory_space<vmem>>, vector<1x32xf32>
    %59 = vector.broadcast %58 : vector<1x32xf32> to vector<128x32xf32>
    %60 = arith.mulf %57, %59 : vector<128x32xf32>
    %c0_57 = arith.constant 0 : index
    %c0_58 = arith.constant 0 : index
    %61 = vector.load %arg4[%c0_57, %c0_58] : memref<1x32xf32, #tpu.memory_space<vmem>>, vector<1x32xf32>
    %62 = vector.broadcast %61 : vector<1x32xf32> to vector<128x32xf32>
    %63 = arith.addf %60, %62 : vector<128x32xf32>
    %cst_59 = arith.constant 1.000000e-01 : f32
    %64 = vector.broadcast %cst_59 : f32 to vector<128x32xf32>
    %65 = arith.mulf %64, %63 : vector<128x32xf32>
    %66 = arith.maximumf %63, %65 : vector<128x32xf32>
    %67 = vector.shape_cast %66 : vector<128x32xf32> to vector<2x8x8x32xf32>
    %c0_60 = arith.constant 0 : index
    %c0_61 = arith.constant 0 : index
    %c0_62 = arith.constant 0 : index
    %c0_63 = arith.constant 0 : index
    %68 = vector.load %arg5[%c0_60, %c0_61, %c0_62, %c0_63] : memref<2x8x8x32xf32, #tpu.memory_space<vmem>>, vector<2x8x8x32xf32>
    tpu.vector_store %arg5[%c0_60, %c0_61, %c0_62, %c0_63], %67 {strides = array<i32>} : memref<2x8x8x32xf32, #tpu.memory_space<vmem>>, vector<2x8x8x32xf32>,
    return
  }
  func.func @transform_0(%arg0: i32) -> (i32, i32, i32, i32) {
    %c0_i32 = arith.constant 0 : i32
    %c0_i32_0 = arith.constant 0 : i32
    %c0_i32_1 = arith.constant 0 : i32
    %c0_i32_2 = arith.constant 0 : i32
    %c0_i32_3 = arith.constant 0 : i32
    return %c0_i32, %c0_i32_0, %c0_i32_1, %c0_i32_2 : i32, i32, i32, i32
  }
  func.func @transform_1(%arg0: i32) -> (i32, i32, i32) {
    %c0_i32 = arith.constant 0 : i32
    %c0_i32_0 = arith.constant 0 : i32
    %c0_i32_1 = arith.constant 0 : i32
    return %c0_i32, %c0_i32_0, %arg0 : i32, i32, i32
  }
  func.func @transform_2(%arg0: i32) -> (i32, i32) {
    %c0_i32 = arith.constant 0 : i32
    %c0_i32_0 = arith.constant 0 : i32
    return %c0_i32, %arg0 : i32, i32
  }
  func.func @transform_3(%arg0: i32) -> (i32, i32) {
    %c0_i32 = arith.constant 0 : i32
    %c0_i32_0 = arith.constant 0 : i32
    return %c0_i32, %arg0 : i32, i32
  }
  func.func @transform_4(%arg0: i32) -> (i32, i32, i32, i32) {
    %c0_i32 = arith.constant 0 : i32
    %c0_i32_0 = arith.constant 0 : i32
    %c0_i32_1 = arith.constant 0 : i32
    %c0_i32_2 = arith.constant 0 : i32
    return %c0_i32, %c0_i32_0, %c0_i32_1, %arg0 : i32, i32, i32, i32
  }
}

</mosaic_0001>

<llo_original>
// kernel: tpu_custom_call.1
$region0: #{tpu_custom_call.1}
  #allocation0 [shape = 'u32[]', space=smem, size = 0x4, offset = 0x4, fixed_abs, tag = 'smem constant byte address 0x4 - core index']
  #allocation1 [shape = 'u32[72,128]{1,0:T(1,128)}', space=vmem, size = 0x9000, scoped, tag = 'internal scratch']
  #allocation2 [shape = 'f32[2,10,10,16]{3,2,1,0:T(8,128)}', space=vmem, size = 0x28000, scoped, tag = 'scratch operand']
  #allocation3 [shape = 'f32[9,128,16]{2,1,0:T(8,128)}', space=vmem, size = 0x90000, scoped, tag = 'scratch operand']
  %s0 = inlined_call_operand.hbm [shape: f32[2,8,8,16], index: 0, kind: input, shape index: {}]
  %s1 = inlined_call_operand.hbm [shape: f32[9,16,32], index: 1, kind: input, shape index: {}]
  %s2 = inlined_call_operand.vmem [shape: f32[1,32], index: 2, kind: input, shape index: {}]
  %s3 = inlined_call_operand.vmem [shape: f32[1,32], index: 3, kind: input, shape index: {}]
  %s4 = inlined_call_operand.hbm [shape: f32[2,8,8,32], index: 4, kind: output, shape index: {}]
  %s5 = sld [smem:[#allocation0]]
  $region38: #{tpu_custom_call.1} parent=0
    _
  %s7 = ssub.s32 1, %s5
  %s8 = scalar_select 0, %s7, %s5
  $region1: #{tpu_custom_call.1} parent=0
    #allocation4 [shape = 'u8[65536]{0}', space=vmem, size = 0x10000, scoped, tag = 'input window, operand 0, single buffered']
    #allocation5 [shape = 's32[1]{0}', space=sflag, size = 0x4, scoped, tag = 'scoped memory for tpu_custom_call.1']
    #allocation6 [shape = 's32[1]{0}', space=sflag, size = 0x4, scoped, tag = 'scoped memory for tpu_custom_call.1']
    #allocation7 [shape = 'u8[73728]{0}', space=vmem, size = 0x12000, scoped, tag = 'input window, operand 1, single buffered']
    #allocation8 [shape = 's32[1]{0}', space=sflag, size = 0x4, scoped, tag = 'scoped memory for tpu_custom_call.1']
    #allocation9 [shape = 'u8[65536]{0}', space=vmem, size = 0x10000, scoped, tag = 'output window, operand 0, single buffered']
    %9 = vsyncpa [#allocation5], 0
    %10 = vsyncpa [#allocation8], 0
    %11 = vsyncpa [#allocation6], 0
    // Predicated region
    $region2: #{tpu_custom_call.1} parent=1 // pred_check
      _
    $region3: #{tpu_custom_call.1} parent=1 // pred_check_branch
      %13 = sbr.rel (0) target = $region5
    $region4: #{tpu_custom_call.1} parent=1 // pred_region
      %15 = vsyncadd [#allocation5], 0
      %s16 = sshll.u32 %s0, 4
      %s17 = int_to_ptr.hbm [resolvable:$true] %s16
      %s18 = sshll.u32 [#allocation4], 4
      %s19 = int_to_ptr.vmem [resolvable:$true] %s18
      %24 = dma.hbm_to_vmem [thread:$0]  %s17, 2048, %s19, [#allocation5], 128, 128, 8
    $region5: #{tpu_custom_call.1} parent=1 // pred_fallthru
      _
    // Predicated region
    $region6: #{tpu_custom_call.1} parent=1 // pred_check
      _
    $region7: #{tpu_custom_call.1} parent=1 // pred_check_branch
      %26 = sbr.rel (0) target = $region9
    $region8: #{tpu_custom_call.1} parent=1 // pred_region
      %28 = vsyncadd [#allocation8], 0
      %s29 = sshll.u32 %s1, 4
      %s30 = int_to_ptr.hbm [resolvable:$true] %s29
      %s31 = sshll.u32 [#allocation7], 4
      %s32 = int_to_ptr.vmem [resolvable:$true] %s31
      %37 = dma.hbm_to_vmem [thread:$0]  %s30, 2304, %s32, [#allocation8], 128, 128, 8
    $region9: #{tpu_custom_call.1} parent=1 // pred_fallthru
      _
    // Predicated region
    $region10: #{tpu_custom_call.1} parent=1 // pred_check
      _
    $region11: #{tpu_custom_call.1} parent=1 // pred_check_branch
      %39 = sbr.rel (0) target = $region13
    $region12: #{tpu_custom_call.1} parent=1 // pred_region
      _
    $region13: #{tpu_custom_call.1} parent=1 // pred_fallthru
      _
    // Predicated region
    $region14: #{tpu_custom_call.1} parent=1 // pred_check
      _
    $region15: #{tpu_custom_call.1} parent=1 // pred_check_branch
      %41 = sbr.rel (0) target = $region17
    $region16: #{tpu_custom_call.1} parent=1 // pred_region
      _
    $region17: #{tpu_custom_call.1} parent=1 // pred_fallthru
      _
    // Predicated region
    $region18: #{tpu_custom_call.1} parent=1 // pred_check
      _
    $region19: #{tpu_custom_call.1} parent=1 // pred_check_branch
      %43 = sbr.rel (0) target = $region21
    $region20: #{tpu_custom_call.1} parent=1 // pred_region
      %45 = dma.done [#allocation5], 2048
    $region21: #{tpu_custom_call.1} parent=1 // pred_fallthru
      _
    // Predicated region
    $region22: #{tpu_custom_call.1} parent=1 // pred_check
      _
    $region23: #{tpu_custom_call.1} parent=1 // pred_check_branch
      %47 = sbr.rel (0) target = $region25
    $region24: #{tpu_custom_call.1} parent=1 // pred_region
      %49 = dma.done [#allocation8], 2304
    $region25: #{tpu_custom_call.1} parent=1 // pred_fallthru
      _
    %p50 = scmp.eq.s32.totalorder 0, 0
    // Predicated region
    $region26: #{tpu_custom_call.1} parent=1 // pred_check
      %p51 = pneg %p50
    $region27: #{tpu_custom_call.1} parent=1 // pred_check_branch
      %53 = sbr.rel (%p51) target = $region29
    $region28: #{tpu_custom_call.1} parent=1 // pred_region
      %vm54 = vcmask 130048
      %55 = vst.msk [vmem:[#allocation2] sm:$0xff] %vm54, 0.0
      %vm56 = vcmask 123904
      %57 = vst.msk [vmem:[#allocation2 + $0x8] sm:$0x3] %vm56, 0.0
      %58 = vst.msk [vmem:[#allocation2 + $0x10] sm:$0xff] %vm54, 0.0
      %59 = vst.msk [vmem:[#allocation2 + $0x18] sm:$0x3] %vm56, 0.0
      %60 = vst.msk [vmem:[#allocation2 + $0x20] sm:$0xff] %vm54, 0.0
      %61 = vst.msk [vmem:[#allocation2 + $0x28] sm:$0x3] %vm56, 0.0
      %62 = vst.msk [vmem:[#allocation2 + $0x30] sm:$0xff] %vm54, 0.0
      %63 = vst.msk [vmem:[#allocation2 + $0x38] sm:$0x3] %vm56, 0.0
      %64 = vst.msk [vmem:[#allocation2 + $0x40] sm:$0xff] %vm54, 0.0
      %65 = vst.msk [vmem:[#allocation2 + $0x48] sm:$0x3] %vm56, 0.0
      %66 = vst.msk [vmem:[#allocation2 + $0x50] sm:$0xff] %vm54, 0.0
      %67 = vst.msk [vmem:[#allocation2 + $0x58] sm:$0x3] %vm56, 0.0
      %68 = vst.msk [vmem:[#allocation2 + $0x60] sm:$0xff] %vm54, 0.0
      %69 = vst.msk [vmem:[#allocation2 + $0x68] sm:$0x3] %vm56, 0.0
      %70 = vst.msk [vmem:[#allocation2 + $0x70] sm:$0xff] %vm54, 0.0
      %71 = vst.msk [vmem:[#allocation2 + $0x78] sm:$0x3] %vm56, 0.0
      %72 = vst.msk [vmem:[#allocation2 + $0x80] sm:$0xff] %vm54, 0.0
      %73 = vst.msk [vmem:[#allocation2 + $0x88] sm:$0x3] %vm56, 0.0
      %74 = vst.msk [vmem:[#allocation2 + $0x90] sm:$0xff] %vm54, 0.0
      %75 = vst.msk [vmem:[#allocation2 + $0x98] sm:$0x3] %vm56, 0.0
      %76 = vst.msk [vmem:[#allocation2 + $0xa0] sm:$0xff] %vm54, 0.0
      %77 = vst.msk [vmem:[#allocation2 + $0xa8] sm:$0x3] %vm56, 0.0
      %78 = vst.msk [vmem:[#allocation2 + $0xb0] sm:$0xff] %vm54, 0.0
      %79 = vst.msk [vmem:[#allocation2 + $0xb8] sm:$0x3] %vm56, 0.0
      %80 = vst.msk [vmem:[#allocation2 + $0xc0] sm:$0xff] %vm54, 0.0
      %81 = vst.msk [vmem:[#allocation2 + $0xc8] sm:$0x3] %vm56, 0.0
      %82 = vst.msk [vmem:[#allocation2 + $0xd0] sm:$0xff] %vm54, 0.0
      %83 = vst.msk [vmem:[#allocation2 + $0xd8] sm:$0x3] %vm56, 0.0
      %84 = vst.msk [vmem:[#allocation2 + $0xe0] sm:$0xff] %vm54, 0.0
      %85 = vst.msk [vmem:[#allocation2 + $0xe8] sm:$0x3] %vm56, 0.0
      %86 = vst.msk [vmem:[#allocation2 + $0xf0] sm:$0xff] %vm54, 0.0
      %87 = vst.msk [vmem:[#allocation2 + $0xf8] sm:$0x3] %vm56, 0.0
      %88 = vst.msk [vmem:[#allocation2 + $0x100] sm:$0xff] %vm54, 0.0
      %89 = vst.msk [vmem:[#allocation2 + $0x108] sm:$0x3] %vm56, 0.0
      %90 = vst.msk [vmem:[#allocation2 + $0x110] sm:$0xff] %vm54, 0.0
      %91 = vst.msk [vmem:[#allocation2 + $0x118] sm:$0x3] %vm56, 0.0
      %92 = vst.msk [vmem:[#allocation2 + $0x120] sm:$0xff] %vm54, 0.0
      %93 = vst.msk [vmem:[#allocation2 + $0x128] sm:$0x3] %vm56, 0.0
      %94 = vst.msk [vmem:[#allocation2 + $0x130] sm:$0xff] %vm54, 0.0
      %95 = vst.msk [vmem:[#allocation2 + $0x138] sm:$0x3] %vm56, 0.0
      %v96 = vld [vmem:[#allocation4] sm:$0xff]
      %v97 = vld [vmem:[#allocation4 + $0x8] sm:$0xff]
      %v98 = vld [vmem:[#allocation4 + $0x10] sm:$0xff]
      %v99 = vld [vmem:[#allocation4 + $0x18] sm:$0xff]
      %v100 = vld [vmem:[#allocation4 + $0x20] sm:$0xff]
      %v101 = vld [vmem:[#allocation4 + $0x28] sm:$0xff]
      %v102 = vld [vmem:[#allocation4 + $0x30] sm:$0xff]
      %v103 = vld [vmem:[#allocation4 + $0x38] sm:$0xff]
      %v104 = vld [vmem:[#allocation4 + $0x40] sm:$0xff]
      %v105 = vld [vmem:[#allocation4 + $0x48] sm:$0xff]
      %v106 = vld [vmem:[#allocation4 + $0x50] sm:$0xff]
      %v107 = vld [vmem:[#allocation4 + $0x58] sm:$0xff]
      %v108 = vld [vmem:[#allocation4 + $0x60] sm:$0xff]
      %v109 = vld [vmem:[#allocation4 + $0x68] sm:$0xff]
      %v110 = vld [vmem:[#allocation4 + $0x70] sm:$0xff]
      %v111 = vld [vmem:[#allocation4 + $0x78] sm:$0xff]
      %s112 = scalar_lea.vmem [#allocation2], 16
      %113 = vst.msk [vmem:[%s112 + $0x1] sm:$0xff] %vm54, %v96
      %114 = vst.msk [vmem:[%s112 + $0x11] sm:$0xff] %vm54, %v97
      %115 = vst.msk [vmem:[%s112 + $0x21] sm:$0xff] %vm54, %v98
      %116 = vst.msk [vmem:[%s112 + $0x31] sm:$0xff] %vm54, %v99
      %117 = vst.msk [vmem:[%s112 + $0x41] sm:$0xff] %vm54, %v100
      %118 = vst.msk [vmem:[%s112 + $0x51] sm:$0xff] %vm54, %v101
      %119 = vst.msk [vmem:[%s112 + $0x61] sm:$0xff] %vm54, %v102
      %120 = vst.msk [vmem:[%s112 + $0x71] sm:$0xff] %vm54, %v103
      %121 = vst.msk [vmem:[%s112 + $0xa1] sm:$0xff] %vm54, %v104
      %122 = vst.msk [vmem:[%s112 + $0xb1] sm:$0xff] %vm54, %v105
      %123 = vst.msk [vmem:[%s112 + $0xc1] sm:$0xff] %vm54, %v106
      %124 = vst.msk [vmem:[%s112 + $0xd1] sm:$0xff] %vm54, %v107
      %125 = vst.msk [vmem:[%s112 + $0xe1] sm:$0xff] %vm54, %v108
      %126 = vst.msk [vmem:[%s112 + $0xf1] sm:$0xff] %vm54, %v109
      %127 = vst.msk [vmem:[%s112 + $0x101] sm:$0xff] %vm54, %v110
      %128 = vst.msk [vmem:[%s112 + $0x111] sm:$0xff] %vm54, %v111
      %v129 = vld [vmem:[#allocation2] sm:$0xff]
      %v130 = vld [vmem:[#allocation2 + $0x10] sm:$0xff]
      %v131 = vld [vmem:[#allocation2 + $0x20] sm:$0xff]
      %v132 = vld [vmem:[#allocation2 + $0x30] sm:$0xff]
      %v133 = vld [vmem:[#allocation2 + $0x40] sm:$0xff]
      %v134 = vld [vmem:[#allocation2 + $0x50] sm:$0xff]
      %v135 = vld [vmem:[#allocation2 + $0x60] sm:$0xff]
      %v136 = vld [vmem:[#allocation2 + $0x70] sm:$0xff]
      %v137 = vld [vmem:[#allocation2 + $0xa0] sm:$0xff]
      %v138 = vld [vmem:[#allocation2 + $0xb0] sm:$0xff]
      %v139 = vld [vmem:[#allocation2 + $0xc0] sm:$0xff]
      %v140 = vld [vmem:[#allocation2 + $0xd0] sm:$0xff]
      %v141 = vld [vmem:[#allocation2 + $0xe0] sm:$0xff]
      %v142 = vld [vmem:[#allocation2 + $0xf0] sm:$0xff]
      %v143 = vld [vmem:[#allocation2 + $0x100] sm:$0xff]
      %v144 = vld [vmem:[#allocation2 + $0x110] sm:$0xff]
      %145 = vst.msk [vmem:[#allocation3] sm:$0xff] %vm54, %v129
      %146 = vst.msk [vmem:[#allocation3 + $0x8] sm:$0xff] %vm54, %v130
      %147 = vst.msk [vmem:[#allocation3 + $0x10] sm:$0xff] %vm54, %v131
      %148 = vst.msk [vmem:[#allocation3 + $0x18] sm:$0xff] %vm54, %v132
      %149 = vst.msk [vmem:[#allocation3 + $0x20] sm:$0xff] %vm54, %v133
      %150 = vst.msk [vmem:[#allocation3 + $0x28] sm:$0xff] %vm54, %v134
      %151 = vst.msk [vmem:[#allocation3 + $0x30] sm:$0xff] %vm54, %v135
      %152 = vst.msk [vmem:[#allocation3 + $0x38] sm:$0xff] %vm54, %v136
      %153 = vst.msk [vmem:[#allocation3 + $0x40] sm:$0xff] %vm54, %v137
      %154 = vst.msk [vmem:[#allocation3 + $0x48] sm:$0xff] %vm54, %v138
      %155 = vst.msk [vmem:[#allocation3 + $0x50] sm:$0xff] %vm54, %v139
      %156 = vst.msk [vmem:[#allocation3 + $0x58] sm:$0xff] %vm54, %v140
      %157 = vst.msk [vmem:[#allocation3 + $0x60] sm:$0xff] %vm54, %v141
      %158 = vst.msk [vmem:[#allocation3 + $0x68] sm:$0xff] %vm54, %v142
      %159 = vst.msk [vmem:[#allocation3 + $0x70] sm:$0xff] %vm54, %v143
      %160 = vst.msk [vmem:[#allocation3 + $0x78] sm:$0xff] %vm54, %v144
      %v161 = vld [vmem:[#allocation2 + $0x1] sm:$0xff]
      %v162 = vld [vmem:[#allocation2 + $0x11] sm:$0xff]
      %v163 = vld [vmem:[#allocation2 + $0x21] sm:$0xff]
      %v164 = vld [vmem:[#allocation2 + $0x31] sm:$0xff]
      %v165 = vld [vmem:[#allocation2 + $0x41] sm:$0xff]
      %v166 = vld [vmem:[#allocation2 + $0x51] sm:$0xff]
      %v167 = vld [vmem:[#allocation2 + $0x61] sm:$0xff]
      %v168 = vld [vmem:[#allocation2 + $0x71] sm:$0xff]
      %v169 = vld [vmem:[#allocation2 + $0xa1] sm:$0xff]
      %v170 = vld [vmem:[#allocation2 + $0xb1] sm:$0xff]
      %v171 = vld [vmem:[#allocation2 + $0xc1] sm:$0xff]
      %v172 = vld [vmem:[#allocation2 + $0xd1] sm:$0xff]
      %v173 = vld [vmem:[#allocation2 + $0xe1] sm:$0xff]
      %v174 = vld [vmem:[#allocation2 + $0xf1] sm:$0xff]
      %v175 = vld [vmem:[#allocation2 + $0x101] sm:$0xff]
      %v176 = vld [vmem:[#allocation2 + $0x111] sm:$0xff]
      %s177 = scalar_lea.vmem [#allocation3], 128
      %178 = vst.msk [vmem:[%s177] sm:$0xff] %vm54, %v161
      %179 = vst.msk [vmem:[%s177 + $0x8] sm:$0xff] %vm54, %v162
      %180 = vst.msk [vmem:[%s177 + $0x10] sm:$0xff] %vm54, %v163
      %181 = vst.msk [vmem:[%s177 + $0x18] sm:$0xff] %vm54, %v164
      %182 = vst.msk [vmem:[%s177 + $0x20] sm:$0xff] %vm54, %v165
      %183 = vst.msk [vmem:[%s177 + $0x28] sm:$0xff] %vm54, %v166
      %184 = vst.msk [vmem:[%s177 + $0x30] sm:$0xff] %vm54, %v167
      %185 = vst.msk [vmem:[%s177 + $0x38] sm:$0xff] %vm54, %v168
      %186 = vst.msk [vmem:[%s177 + $0x40] sm:$0xff] %vm54, %v169
      %187 = vst.msk [vmem:[%s177 + $0x48] sm:$0xff] %vm54, %v170
      %188 = vst.msk [vmem:[%s177 + $0x50] sm:$0xff] %vm54, %v171
      %189 = vst.msk [vmem:[%s177 + $0x58] sm:$0xff] %vm54, %v172
      %190 = vst.msk [vmem:[%s177 + $0x60] sm:$0xff] %vm54, %v173
      %191 = vst.msk [vmem:[%s177 + $0x68] sm:$0xff] %vm54, %v174
      %192 = vst.msk [vmem:[%s177 + $0x70] sm:$0xff] %vm54, %v175
      %193 = vst.msk [vmem:[%s177 + $0x78] sm:$0xff] %vm54, %v176
      %v194 = vld [vmem:[#allocation2 + $0x2] sm:$0xff]
      %v195 = vld [vmem:[#allocation2 + $0x12] sm:$0xff]
      %v196 = vld [vmem:[#allocation2 + $0x22] sm:$0xff]
      %v197 = vld [vmem:[#allocation2 + $0x32] sm:$0xff]
      %v198 = vld [vmem:[#allocation2 + $0x42] sm:$0xff]
      %v199 = vld [vmem:[#allocation2 + $0x52] sm:$0xff]
      %v200 = vld [vmem:[#allocation2 + $0x62] sm:$0xff]
      %v201 = vld [vmem:[#allocation2 + $0x72] sm:$0xff]
      %v202 = vld [vmem:[#allocation2 + $0xa2] sm:$0xff]
      %v203 = vld [vmem:[#allocation2 + $0xb2] sm:$0xff]
      %v204 = vld [vmem:[#allocation2 + $0xc2] sm:$0xff]
      %v205 = vld [vmem:[#allocation2 + $0xd2] sm:$0xff]
      %v206 = vld [vmem:[#allocation2 + $0xe2] sm:$0xff]
      %v207 = vld [vmem:[#allocation2 + $0xf2] sm:$0xff]
      %v208 = vld [vmem:[#allocation2 + $0x102] sm:$0xff]
      %v209 = vld [vmem:[#allocation2 + $0x112] sm:$0xff]
      %s210 = scalar_lea.vmem [#allocation3], 256
      %211 = vst.msk [vmem:[%s210] sm:$0xff] %vm54, %v194
      %212 = vst.msk [vmem:[%s210 + $0x8] sm:$0xff] %vm54, %v195
      %213 = vst.msk [vmem:[%s210 + $0x10] sm:$0xff] %vm54, %v196
      %214 = vst.msk [vmem:[%s210 + $0x18] sm:$0xff] %vm54, %v197
      %215 = vst.msk [vmem:[%s210 + $0x20] sm:$0xff] %vm54, %v198
      %216 = vst.msk [vmem:[%s210 + $0x28] sm:$0xff] %vm54, %v199
      %217 = vst.msk [vmem:[%s210 + $0x30] sm:$0xff] %vm54, %v200
      %218 = vst.msk [vmem:[%s210 + $0x38] sm:$0xff] %vm54, %v201
      %219 = vst.msk [vmem:[%s210 + $0x40] sm:$0xff] %vm54, %v202
      %220 = vst.msk [vmem:[%s210 + $0x48] sm:$0xff] %vm54, %v203
      %221 = vst.msk [vmem:[%s210 + $0x50] sm:$0xff] %vm54, %v204
      %222 = vst.msk [vmem:[%s210 + $0x58] sm:$0xff] %vm54, %v205
      %223 = vst.msk [vmem:[%s210 + $0x60] sm:$0xff] %vm54, %v206
      %224 = vst.msk [vmem:[%s210 + $0x68] sm:$0xff] %vm54, %v207
      %225 = vst.msk [vmem:[%s210 + $0x70] sm:$0xff] %vm54, %v208
      %226 = vst.msk [vmem:[%s210 + $0x78] sm:$0xff] %vm54, %v209
      %v227 = vld [vmem:[%s112] sm:$0xff]
      %v228 = vld [vmem:[%s112 + $0x10] sm:$0xff]
      %v229 = vld [vmem:[%s112 + $0x20] sm:$0xff]
      %v230 = vld [vmem:[%s112 + $0x30] sm:$0xff]
      %v231 = vld [vmem:[%s112 + $0x40] sm:$0xff]
      %v232 = vld [vmem:[%s112 + $0x50] sm:$0xff]
      %v233 = vld [vmem:[%s112 + $0x60] sm:$0xff]
      %v234 = vld [vmem:[%s112 + $0x70] sm:$0xff]
      %v235 = vld [vmem:[%s112 + $0xa0] sm:$0xff]
      %v236 = vld [vmem:[%s112 + $0xb0] sm:$0xff]
      %v237 = vld [vmem:[%s112 + $0xc0] sm:$0xff]
      %v238 = vld [vmem:[%s112 + $0xd0] sm:$0xff]
      %v239 = vld [vmem:[%s112 + $0xe0] sm:$0xff]
      %v240 = vld [vmem:[%s112 + $0xf0] sm:$0xff]
      %v241 = vld [vmem:[%s112 + $0x100] sm:$0xff]
      %v242 = vld [vmem:[%s112 + $0x110] sm:$0xff]
      %s243 = scalar_lea.vmem [#allocation3], 384
      %244 = vst.msk [vmem:[%s243] sm:$0xff] %vm54, %v227
      %245 = vst.msk [vmem:[%s243 + $0x8] sm:$0xff] %vm54, %v228
      %246 = vst.msk [vmem:[%s243 + $0x10] sm:$0xff] %vm54, %v229
      %247 = vst.msk [vmem:[%s243 + $0x18] sm:$0xff] %vm54, %v230
      %248 = vst.msk [vmem:[%s243 + $0x20] sm:$0xff] %vm54, %v231
      %249 = vst.msk [vmem:[%s243 + $0x28] sm:$0xff] %vm54, %v232
      %250 = vst.msk [vmem:[%s243 + $0x30] sm:$0xff] %vm54, %v233
      %251 = vst.msk [vmem:[%s243 + $0x38] sm:$0xff] %vm54, %v234
      %252 = vst.msk [vmem:[%s243 + $0x40] sm:$0xff] %vm54, %v235
      %253 = vst.msk [vmem:[%s243 + $0x48] sm:$0xff] %vm54, %v236
      %254 = vst.msk [vmem:[%s243 + $0x50] sm:$0xff] %vm54, %v237
      %255 = vst.msk [vmem:[%s243 + $0x58] sm:$0xff] %vm54, %v238
      %256 = vst.msk [vmem:[%s243 + $0x60] sm:$0xff] %vm54, %v239
      %257 = vst.msk [vmem:[%s243 + $0x68] sm:$0xff] %vm54, %v240
      %258 = vst.msk [vmem:[%s243 + $0x70] sm:$0xff] %vm54, %v241
      %259 = vst.msk [vmem:[%s243 + $0x78] sm:$0xff] %vm54, %v242
      %v260 = vld [vmem:[%s112 + $0x1] sm:$0xff]
      %v261 = vld [vmem:[%s112 + $0x11] sm:$0xff]
      %v262 = vld [vmem:[%s112 + $0x21] sm:$0xff]
      %v263 = vld [vmem:[%s112 + $0x31] sm:$0xff]
      %v264 = vld [vmem:[%s112 + $0x41] sm:$0xff]
      %v265 = vld [vmem:[%s112 + $0x51] sm:$0xff]
      %v266 = vld [vmem:[%s112 + $0x61] sm:$0xff]
      %v267 = vld [vmem:[%s112 + $0x71] sm:$0xff]
      %v268 = vld [vmem:[%s112 + $0xa1] sm:$0xff]
      %v269 = vld [vmem:[%s112 + $0xb1] sm:$0xff]
      %v270 = vld [vmem:[%s112 + $0xc1] sm:$0xff]
      %v271 = vld [vmem:[%s112 + $0xd1] sm:$0xff]
      %v272 = vld [vmem:[%s112 + $0xe1] sm:$0xff]
      %v273 = vld [vmem:[%s112 + $0xf1] sm:$0xff]
      %v274 = vld [vmem:[%s112 + $0x101] sm:$0xff]
      %v275 = vld [vmem:[%s112 + $0x111] sm:$0xff]
      %s276 = scalar_lea.vmem [#allocation3], 512
      %277 = vst.msk [vmem:[%s276] sm:$0xff] %vm54, %v260
      %278 = vst.msk [vmem:[%s276 + $0x8] sm:$0xff] %vm54, %v261
      %279 = vst.msk [vmem:[%s276 + $0x10] sm:$0xff] %vm54, %v262
      %280 = vst.msk [vmem:[%s276 + $0x18] sm:$0xff] %vm54, %v263
      %281 = vst.msk [vmem:[%s276 + $0x20] sm:$0xff] %vm54, %v264
      %282 = vst.msk [vmem:[%s276 + $0x28] sm:$0xff] %vm54, %v265
      %283 = vst.msk [vmem:[%s276 + $0x30] sm:$0xff] %vm54, %v266
      %284 = vst.msk [vmem:[%s276 + $0x38] sm:$0xff] %vm54, %v267
      %285 = vst.msk [vmem:[%s276 + $0x40] sm:$0xff] %vm54, %v268
      %286 = vst.msk [vmem:[%s276 + $0x48] sm:$0xff] %vm54, %v269
      %287 = vst.msk [vmem:[%s276 + $0x50] sm:$0xff] %vm54, %v270
      %288 = vst.msk [vmem:[%s276 + $0x58] sm:$0xff] %vm54, %v271
      %289 = vst.msk [vmem:[%s276 + $0x60] sm:$0xff] %vm54, %v272
      %290 = vst.msk [vmem:[%s276 + $0x68] sm:$0xff] %vm54, %v273
      %291 = vst.msk [vmem:[%s276 + $0x70] sm:$0xff] %vm54, %v274
      %292 = vst.msk [vmem:[%s276 + $0x78] sm:$0xff] %vm54, %v275
      %v293 = vld [vmem:[%s112 + $0x2] sm:$0xff]
      %v294 = vld [vmem:[%s112 + $0x12] sm:$0xff]
      %v295 = vld [vmem:[%s112 + $0x22] sm:$0xff]
      %v296 = vld [vmem:[%s112 + $0x32] sm:$0xff]
      %v297 = vld [vmem:[%s112 + $0x42] sm:$0xff]
      %v298 = vld [vmem:[%s112 + $0x52] sm:$0xff]
      %v299 = vld [vmem:[%s112 + $0x62] sm:$0xff]
      %v300 = vld [vmem:[%s112 + $0x72] sm:$0xff]
      %v301 = vld [vmem:[%s112 + $0xa2] sm:$0xff]
      %v302 = vld [vmem:[%s112 + $0xb2] sm:$0xff]
      %v303 = vld [vmem:[%s112 + $0xc2] sm:$0xff]
      %v304 = vld [vmem:[%s112 + $0xd2] sm:$0xff]
      %v305 = vld [vmem:[%s112 + $0xe2] sm:$0xff]
      %v306 = vld [vmem:[%s112 + $0xf2] sm:$0xff]
      %v307 = vld [vmem:[%s112 + $0x102] sm:$0xff]
      %v308 = vld [vmem:[%s112 + $0x112] sm:$0xff]
      %s309 = scalar_lea.vmem [#allocation3], 640
      %310 = vst.msk [vmem:[%s309] sm:$0xff] %vm54, %v293
      %311 = vst.msk [vmem:[%s309 + $0x8] sm:$0xff] %vm54, %v294
      %312 = vst.msk [vmem:[%s309 + $0x10] sm:$0xff] %vm54, %v295
      %313 = vst.msk [vmem:[%s309 + $0x18] sm:$0xff] %vm54, %v296
      %314 = vst.msk [vmem:[%s309 + $0x20] sm:$0xff] %vm54, %v297
      %315 = vst.msk [vmem:[%s309 + $0x28] sm:$0xff] %vm54, %v298
      %316 = vst.msk [vmem:[%s309 + $0x30] sm:$0xff] %vm54, %v299
      %317 = vst.msk [vmem:[%s309 + $0x38] sm:$0xff] %vm54, %v300
      %318 = vst.msk [vmem:[%s309 + $0x40] sm:$0xff] %vm54, %v301
      %319 = vst.msk [vmem:[%s309 + $0x48] sm:$0xff] %vm54, %v302
      %320 = vst.msk [vmem:[%s309 + $0x50] sm:$0xff] %vm54, %v303
      %321 = vst.msk [vmem:[%s309 + $0x58] sm:$0xff] %vm54, %v304
      %322 = vst.msk [vmem:[%s309 + $0x60] sm:$0xff] %vm54, %v305
      %323 = vst.msk [vmem:[%s309 + $0x68] sm:$0xff] %vm54, %v306
      %324 = vst.msk [vmem:[%s309 + $0x70] sm:$0xff] %vm54, %v307
      %325 = vst.msk [vmem:[%s309 + $0x78] sm:$0xff] %vm54, %v308
      %s326 = scalar_lea.vmem [#allocation2], 32
      %v327 = vld [vmem:[%s326] sm:$0xff]
      %v328 = vld [vmem:[%s326 + $0x10] sm:$0xff]
      %v329 = vld [vmem:[%s326 + $0x20] sm:$0xff]
      %v330 = vld [vmem:[%s326 + $0x30] sm:$0xff]
      %v331 = vld [vmem:[%s326 + $0x40] sm:$0xff]
      %v332 = vld [vmem:[%s326 + $0x50] sm:$0xff]
      %v333 = vld [vmem:[%s326 + $0x60] sm:$0xff]
      %v334 = vld [vmem:[%s326 + $0x70] sm:$0xff]
      %v335 = vld [vmem:[%s326 + $0xa0] sm:$0xff]
      %v336 = vld [vmem:[%s326 + $0xb0] sm:$0xff]
      %v337 = vld [vmem:[%s326 + $0xc0] sm:$0xff]
      %v338 = vld [vmem:[%s326 + $0xd0] sm:$0xff]
      %v339 = vld [vmem:[%s326 + $0xe0] sm:$0xff]
      %v340 = vld [vmem:[%s326 + $0xf0] sm:$0xff]
      %v341 = vld [vmem:[%s326 + $0x100] sm:$0xff]
      %v342 = vld [vmem:[%s326 + $0x110] sm:$0xff]
      %s343 = scalar_lea.vmem [#allocation3], 768
      %344 = vst.msk [vmem:[%s343] sm:$0xff] %vm54, %v327
      %345 = vst.msk [vmem:[%s343 + $0x8] sm:$0xff] %vm54, %v328
      %346 = vst.msk [vmem:[%s343 + $0x10] sm:$0xff] %vm54, %v329
      %347 = vst.msk [vmem:[%s343 + $0x18] sm:$0xff] %vm54, %v330
      %348 = vst.msk [vmem:[%s343 + $0x20] sm:$0xff] %vm54, %v331
      %349 = vst.msk [vmem:[%s343 + $0x28] sm:$0xff] %vm54, %v332
      %350 = vst.msk [vmem:[%s343 + $0x30] sm:$0xff] %vm54, %v333
      %351 = vst.msk [vmem:[%s343 + $0x38] sm:$0xff] %vm54, %v334
      %352 = vst.msk [vmem:[%s343 + $0x40] sm:$0xff] %vm54, %v335
      %353 = vst.msk [vmem:[%s343 + $0x48] sm:$0xff] %vm54, %v336
      %354 = vst.msk [vmem:[%s343 + $0x50] sm:$0xff] %vm54, %v337
      %355 = vst.msk [vmem:[%s343 + $0x58] sm:$0xff] %vm54, %v338
      %356 = vst.msk [vmem:[%s343 + $0x60] sm:$0xff] %vm54, %v339
      %357 = vst.msk [vmem:[%s343 + $0x68] sm:$0xff] %vm54, %v340
      %358 = vst.msk [vmem:[%s343 + $0x70] sm:$0xff] %vm54, %v341
      %359 = vst.msk [vmem:[%s343 + $0x78] sm:$0xff] %vm54, %v342
      %v360 = vld [vmem:[%s326 + $0x1] sm:$0xff]
      %v361 = vld [vmem:[%s326 + $0x11] sm:$0xff]
      %v362 = vld [vmem:[%s326 + $0x21] sm:$0xff]
      %v363 = vld [vmem:[%s326 + $0x31] sm:$0xff]
      %v364 = vld [vmem:[%s326 + $0x41] sm:$0xff]
      %v365 = vld [vmem:[%s326 + $0x51] sm:$0xff]
      %v366 = vld [vmem:[%s326 + $0x61] sm:$0xff]
      %v367 = vld [vmem:[%s326 + $0x71] sm:$0xff]
      %v368 = vld [vmem:[%s326 + $0xa1] sm:$0xff]
      %v369 = vld [vmem:[%s326 + $0xb1] sm:$0xff]
      %v370 = vld [vmem:[%s326 + $0xc1] sm:$0xff]
      %v371 = vld [vmem:[%s326 + $0xd1] sm:$0xff]
      %v372 = vld [vmem:[%s326 + $0xe1] sm:$0xff]
      %v373 = vld [vmem:[%s326 + $0xf1] sm:$0xff]
      %v374 = vld [vmem:[%s326 + $0x101] sm:$0xff]
      %v375 = vld [vmem:[%s326 + $0x111] sm:$0xff]
      %s376 = scalar_lea.vmem [#allocation3], 896
      %377 = vst.msk [vmem:[%s376] sm:$0xff] %vm54, %v360
      %378 = vst.msk [vmem:[%s376 + $0x8] sm:$0xff] %vm54, %v361
      %379 = vst.msk [vmem:[%s376 + $0x10] sm:$0xff] %vm54, %v362
      %380 = vst.msk [vmem:[%s376 + $0x18] sm:$0xff] %vm54, %v363
      %381 = vst.msk [vmem:[%s376 + $0x20] sm:$0xff] %vm54, %v364
      %382 = vst.msk [vmem:[%s376 + $0x28] sm:$0xff] %vm54, %v365
      %383 = vst.msk [vmem:[%s376 + $0x30] sm:$0xff] %vm54, %v366
      %384 = vst.msk [vmem:[%s376 + $0x38] sm:$0xff] %vm54, %v367
      %385 = vst.msk [vmem:[%s376 + $0x40] sm:$0xff] %vm54, %v368
      %386 = vst.msk [vmem:[%s376 + $0x48] sm:$0xff] %vm54, %v369
      %387 = vst.msk [vmem:[%s376 + $0x50] sm:$0xff] %vm54, %v370
      %388 = vst.msk [vmem:[%s376 + $0x58] sm:$0xff] %vm54, %v371
      %389 = vst.msk [vmem:[%s376 + $0x60] sm:$0xff] %vm54, %v372
      %390 = vst.msk [vmem:[%s376 + $0x68] sm:$0xff] %vm54, %v373
      %391 = vst.msk [vmem:[%s376 + $0x70] sm:$0xff] %vm54, %v374
      %392 = vst.msk [vmem:[%s376 + $0x78] sm:$0xff] %vm54, %v375
      %v393 = vld [vmem:[%s326 + $0x2] sm:$0xff]
      %v394 = vld [vmem:[%s326 + $0x12] sm:$0xff]
      %v395 = vld [vmem:[%s326 + $0x22] sm:$0xff]
      %v396 = vld [vmem:[%s326 + $0x32] sm:$0xff]
      %v397 = vld [vmem:[%s326 + $0x42] sm:$0xff]
      %v398 = vld [vmem:[%s326 + $0x52] sm:$0xff]
      %v399 = vld [vmem:[%s326 + $0x62] sm:$0xff]
      %v400 = vld [vmem:[%s326 + $0x72] sm:$0xff]
      %v401 = vld [vmem:[%s326 + $0xa2] sm:$0xff]
      %v402 = vld [vmem:[%s326 + $0xb2] sm:$0xff]
      %v403 = vld [vmem:[%s326 + $0xc2] sm:$0xff]
      %v404 = vld [vmem:[%s326 + $0xd2] sm:$0xff]
      %v405 = vld [vmem:[%s326 + $0xe2] sm:$0xff]
      %v406 = vld [vmem:[%s326 + $0xf2] sm:$0xff]
      %v407 = vld [vmem:[%s326 + $0x102] sm:$0xff]
      %v408 = vld [vmem:[%s326 + $0x112] sm:$0xff]
      %s409 = scalar_lea.vmem [#allocation3], 1024
      %410 = vst.msk [vmem:[%s409] sm:$0xff] %vm54, %v393
      %411 = vst.msk [vmem:[%s409 + $0x8] sm:$0xff] %vm54, %v394
      %412 = vst.msk [vmem:[%s409 + $0x10] sm:$0xff] %vm54, %v395
      %413 = vst.msk [vmem:[%s409 + $0x18] sm:$0xff] %vm54, %v396
      %414 = vst.msk [vmem:[%s409 + $0x20] sm:$0xff] %vm54, %v397
      %415 = vst.msk [vmem:[%s409 + $0x28] sm:$0xff] %vm54, %v398
      %416 = vst.msk [vmem:[%s409 + $0x30] sm:$0xff] %vm54, %v399
      %417 = vst.msk [vmem:[%s409 + $0x38] sm:$0xff] %vm54, %v400
      %418 = vst.msk [vmem:[%s409 + $0x40] sm:$0xff] %vm54, %v401
      %419 = vst.msk [vmem:[%s409 + $0x48] sm:$0xff] %vm54, %v402
      %420 = vst.msk [vmem:[%s409 + $0x50] sm:$0xff] %vm54, %v403
      %421 = vst.msk [vmem:[%s409 + $0x58] sm:$0xff] %vm54, %v404
      %422 = vst.msk [vmem:[%s409 + $0x60] sm:$0xff] %vm54, %v405
      %423 = vst.msk [vmem:[%s409 + $0x68] sm:$0xff] %vm54, %v406
      %424 = vst.msk [vmem:[%s409 + $0x70] sm:$0xff] %vm54, %v407
      %425 = vst.msk [vmem:[%s409 + $0x78] sm:$0xff] %vm54, %v408
    $region29: #{tpu_custom_call.1} parent=1 // pred_fallthru
      _
    %v426 = vld [vmem:[#allocation3] sm:$0xff]
    %v427 = vld [vmem:[#allocation3 + $0x8] sm:$0xff]
    %v428 = vld [vmem:[#allocation3 + $0x10] sm:$0xff]
    %v429 = vld [vmem:[#allocation3 + $0x18] sm:$0xff]
    %v430 = vld [vmem:[#allocation3 + $0x20] sm:$0xff]
    %v431 = vld [vmem:[#allocation3 + $0x28] sm:$0xff]
    %v432 = vld [vmem:[#allocation3 + $0x30] sm:$0xff]
    %v433 = vld [vmem:[#allocation3 + $0x38] sm:$0xff]
    %v434 = vld [vmem:[#allocation3 + $0x40] sm:$0xff]
    %v435 = vld [vmem:[#allocation3 + $0x48] sm:$0xff]
    %v436 = vld [vmem:[#allocation3 + $0x50] sm:$0xff]
    %v437 = vld [vmem:[#allocation3 + $0x58] sm:$0xff]
    %v438 = vld [vmem:[#allocation3 + $0x60] sm:$0xff]
    %v439 = vld [vmem:[#allocation3 + $0x68] sm:$0xff]
    %v440 = vld [vmem:[#allocation3 + $0x70] sm:$0xff]
    %v441 = vld [vmem:[#allocation3 + $0x78] sm:$0xff]
    %v442 = vld [vmem:[#allocation7] sm:$0xff]
    %v443 = vld [vmem:[#allocation7 + $0x8] sm:$0xff]
    %s444 = scalar_lea.vmem [#allocation3], 128
    %v445 = vld [vmem:[%s444] sm:$0xff]
    %v446 = vld [vmem:[%s444 + $0x8] sm:$0xff]
    %v447 = vld [vmem:[%s444 + $0x10] sm:$0xff]
    %v448 = vld [vmem:[%s444 + $0x18] sm:$0xff]
    %v449 = vld [vmem:[%s444 + $0x20] sm:$0xff]
    %v450 = vld [vmem:[%s444 + $0x28] sm:$0xff]
    %v451 = vld [vmem:[%s444 + $0x30] sm:$0xff]
    %v452 = vld [vmem:[%s444 + $0x38] sm:$0xff]
    %v453 = vld [vmem:[%s444 + $0x40] sm:$0xff]
    %v454 = vld [vmem:[%s444 + $0x48] sm:$0xff]
    %v455 = vld [vmem:[%s444 + $0x50] sm:$0xff]
    %v456 = vld [vmem:[%s444 + $0x58] sm:$0xff]
    %v457 = vld [vmem:[%s444 + $0x60] sm:$0xff]
    %v458 = vld [vmem:[%s444 + $0x68] sm:$0xff]
    %v459 = vld [vmem:[%s444 + $0x70] sm:$0xff]
    %v460 = vld [vmem:[%s444 + $0x78] sm:$0xff]
    %s461 = scalar_lea.vmem [#allocation7], 16
    %v462 = vld [vmem:[%s461] sm:$0xff]
    %v463 = vld [vmem:[%s461 + $0x8] sm:$0xff]
    %vm464 = vcmask 130048
    %v466 = vsel %vm464, %v445, 0
    %v469 = vsel %vm464, %v446, 0
    %v472 = vsel %vm464, %v447, 0
    %v475 = vsel %vm464, %v448, 0
    %v478 = vsel %vm464, %v449, 0
    %v481 = vsel %vm464, %v450, 0
    %v484 = vsel %vm464, %v451, 0
    %v487 = vsel %vm464, %v452, 0
    %v490 = vsel %vm464, %v453, 0
    %v493 = vsel %vm464, %v454, 0
    %v496 = vsel %vm464, %v455, 0
    %v499 = vsel %vm464, %v456, 0
    %v502 = vsel %vm464, %v457, 0
    %v505 = vsel %vm464, %v458, 0
    %v508 = vsel %vm464, %v459, 0
    %v511 = vsel %vm464, %v460, 0
    %513 = vmatpush.msra.mxu0 0.0
    %514 = vmatpush.msra.mxu0 0.0
    %515 = vmatpush.msra.mxu0 0.0
    %516 = vmatpush.msra.mxu0 0.0
    %517 = vmatpush.msra.mxu0 0.0
    %518 = vmatpush.msra.mxu0 0.0
    %519 = vmatpush.msra.mxu0 0.0
    %520 = vmatpush.msra.mxu0 0.0
    %521 = vmatpush.msra.mxu0 0.0
    %522 = vmatpush.msra.mxu0 0.0
    %523 = vmatpush.msra.mxu0 0.0
    %524 = vmatpush.msra.mxu0 0.0
    %525 = vmatpush.msra.mxu0 0.0
    %526 = vmatpush.msra.mxu0 0.0
    %527 = vmatpush.msra.mxu0 %v463
    %528 = vmatpush.msra.mxu0 %v462
    %529 = vmatmul.f32.gmra.mxu0 %v466
    %v530 = vpop.f32.mrf.mxu0
    %v531 = vadd.f32 0.0, %v530
    %532 = vmatmul.f32.gmra.mxu0 %v469
    %v533 = vpop.f32.mrf.mxu0
    %v534 = vadd.f32 0.0, %v533
    %535 = vmatmul.f32.gmra.mxu0 %v472
    %v536 = vpop.f32.mrf.mxu0
    %v537 = vadd.f32 0.0, %v536
    %538 = vmatmul.f32.gmra.mxu0 %v475
    %v539 = vpop.f32.mrf.mxu0
    %v540 = vadd.f32 0.0, %v539
    %541 = vmatmul.f32.gmra.mxu0 %v478
    %v542 = vpop.f32.mrf.mxu0
    %v543 = vadd.f32 0.0, %v542
    %544 = vmatmul.f32.gmra.mxu0 %v481
    %v545 = vpop.f32.mrf.mxu0
    %v546 = vadd.f32 0.0, %v545
    %547 = vmatmul.f32.gmra.mxu0 %v484
    %v548 = vpop.f32.mrf.mxu0
    %v549 = vadd.f32 0.0, %v548
    %550 = vmatmul.f32.gmra.mxu0 %v487
    %v551 = vpop.f32.mrf.mxu0
    %v552 = vadd.f32 0.0, %v551
    %553 = vmatmul.f32.gmra.mxu0 %v490
    %v554 = vpop.f32.mrf.mxu0
    %v555 = vadd.f32 0.0, %v554
    %556 = vmatmul.f32.gmra.mxu0 %v493
    %v557 = vpop.f32.mrf.mxu0
    %v558 = vadd.f32 0.0, %v557
    %559 = vmatmul.f32.gmra.mxu0 %v496
    %v560 = vpop.f32.mrf.mxu0
    %v561 = vadd.f32 0.0, %v560
    %562 = vmatmul.f32.gmra.mxu0 %v499
    %v563 = vpop.f32.mrf.mxu0
    %v564 = vadd.f32 0.0, %v563
    %565 = vmatmul.f32.gmra.mxu0 %v502
    %v566 = vpop.f32.mrf.mxu0
    %v567 = vadd.f32 0.0, %v566
    %568 = vmatmul.f32.gmra.mxu0 %v505
    %v569 = vpop.f32.mrf.mxu0
    %v570 = vadd.f32 0.0, %v569
    %571 = vmatmul.f32.gmra.mxu0 %v508
    %v572 = vpop.f32.mrf.mxu0
    %v573 = vadd.f32 0.0, %v572
    %574 = vmatmul.f32.gmra.mxu0 %v511
    %v575 = vpop.f32.mrf.mxu0
    %v576 = vadd.f32 0.0, %v575
    %577 = vdwg.mxu0
    %v579 = vsel %vm464, %v426, 0
    %v582 = vsel %vm464, %v427, 0
    %v585 = vsel %vm464, %v428, 0
    %v588 = vsel %vm464, %v429, 0
    %v591 = vsel %vm464, %v430, 0
    %v594 = vsel %vm464, %v431, 0
    %v597 = vsel %vm464, %v432, 0
    %v600 = vsel %vm464, %v433, 0
    %v603 = vsel %vm464, %v434, 0
    %v606 = vsel %vm464, %v435, 0
    %v609 = vsel %vm464, %v436, 0
    %v612 = vsel %vm464, %v437, 0
    %v615 = vsel %vm464, %v438, 0
    %v618 = vsel %vm464, %v439, 0
    %v621 = vsel %vm464, %v440, 0
    %v624 = vsel %vm464, %v441, 0
    %626 = vmatpush.msra.mxu0 0.0
    %627 = vmatpush.msra.mxu0 0.0
    %628 = vmatpush.msra.mxu0 0.0
    %629 = vmatpush.msra.mxu0 0.0
    %630 = vmatpush.msra.mxu0 0.0
    %631 = vmatpush.msra.mxu0 0.0
    %632 = vmatpush.msra.mxu0 0.0
    %633 = vmatpush.msra.mxu0 0.0
    %634 = vmatpush.msra.mxu0 0.0
    %635 = vmatpush.msra.mxu0 0.0
    %636 = vmatpush.msra.mxu0 0.0
    %637 = vmatpush.msra.mxu0 0.0
    %638 = vmatpush.msra.mxu0 0.0
    %639 = vmatpush.msra.mxu0 0.0
    %640 = vmatpush.msra.mxu0 %v443
    %641 = vmatpush.msra.mxu0 %v442
    %642 = vmatmul.f32.gmra.mxu0 %v579
    %v643 = vpop.f32.mrf.mxu0
    %v644 = vadd.f32 %v531, %v643
    %645 = vmatmul.f32.gmra.mxu0 %v582
    %v646 = vpop.f32.mrf.mxu0
    %v647 = vadd.f32 %v534, %v646
    %648 = vmatmul.f32.gmra.mxu0 %v585
    %v649 = vpop.f32.mrf.mxu0
    %v650 = vadd.f32 %v537, %v649
    %651 = vmatmul.f32.gmra.mxu0 %v588
    %v652 = vpop.f32.mrf.mxu0
    %v653 = vadd.f32 %v540, %v652
    %654 = vmatmul.f32.gmra.mxu0 %v591
    %v655 = vpop.f32.mrf.mxu0
    %v656 = vadd.f32 %v543, %v655
    %657 = vmatmul.f32.gmra.mxu0 %v594
    %v658 = vpop.f32.mrf.mxu0
    %v659 = vadd.f32 %v546, %v658
    %660 = vmatmul.f32.gmra.mxu0 %v597
    %v661 = vpop.f32.mrf.mxu0
    %v662 = vadd.f32 %v549, %v661
    %663 = vmatmul.f32.gmra.mxu0 %v600
    %v664 = vpop.f32.mrf.mxu0
    %v665 = vadd.f32 %v552, %v664
    %666 = vmatmul.f32.gmra.mxu0 %v603
    %v667 = vpop.f32.mrf.mxu0
    %v668 = vadd.f32 %v555, %v667
    %669 = vmatmul.f32.gmra.mxu0 %v606
    %v670 = vpop.f32.mrf.mxu0
    %v671 = vadd.f32 %v558, %v670
    %672 = vmatmul.f32.gmra.mxu0 %v609
    %v673 = vpop.f32.mrf.mxu0
    %v674 = vadd.f32 %v561, %v673
    %675 = vmatmul.f32.gmra.mxu0 %v612
    %v676 = vpop.f32.mrf.mxu0
    %v677 = vadd.f32 %v564, %v676
    %678 = vmatmul.f32.gmra.mxu0 %v615
    %v679 = vpop.f32.mrf.mxu0
    %v680 = vadd.f32 %v567, %v679
    %681 = vmatmul.f32.gmra.mxu0 %v618
    %v682 = vpop.f32.mrf.mxu0
    %v683 = vadd.f32 %v570, %v682
    %684 = vmatmul.f32.gmra.mxu0 %v621
    %v685 = vpop.f32.mrf.mxu0
    %v686 = vadd.f32 %v573, %v685
    %687 = vmatmul.f32.gmra.mxu0 %v624
    %v688 = vpop.f32.mrf.mxu0
    %v689 = vadd.f32 %v576, %v688
    %690 = vdwg.mxu0
    %s691 = scalar_lea.vmem [#allocation3], 256
    %v692 = vld [vmem:[%s691] sm:$0xff]
    %v693 = vld [vmem:[%s691 + $0x8] sm:$0xff]
    %v694 = vld [vmem:[%s691 + $0x10] sm:$0xff]
    %v695 = vld [vmem:[%s691 + $0x18] sm:$0xff]
    %v696 = vld [vmem:[%s691 + $0x20] sm:$0xff]
    %v697 = vld [vmem:[%s691 + $0x28] sm:$0xff]
    %v698 = vld [vmem:[%s691 + $0x30] sm:$0xff]
    %v699 = vld [vmem:[%s691 + $0x38] sm:$0xff]
    %v700 = vld [vmem:[%s691 + $0x40] sm:$0xff]
    %v701 = vld [vmem:[%s691 + $0x48] sm:$0xff]
    %v702 = vld [vmem:[%s691 + $0x50] sm:$0xff]
    %v703 = vld [vmem:[%s691 + $0x58] sm:$0xff]
    %v704 = vld [vmem:[%s691 + $0x60] sm:$0xff]
    %v705 = vld [vmem:[%s691 + $0x68] sm:$0xff]
    %v706 = vld [vmem:[%s691 + $0x70] sm:$0xff]
    %v707 = vld [vmem:[%s691 + $0x78] sm:$0xff]
    %s708 = scalar_lea.vmem [#allocation7], 32
    %v709 = vld [vmem:[%s708] sm:$0xff]
    %v710 = vld [vmem:[%s708 + $0x8] sm:$0xff]
    %v712 = vsel %vm464, %v692, 0
    %v715 = vsel %vm464, %v693, 0
    %v718 = vsel %vm464, %v694, 0
    %v721 = vsel %vm464, %v695, 0
    %v724 = vsel %vm464, %v696, 0
    %v727 = vsel %vm464, %v697, 0
    %v730 = vsel %vm464, %v698, 0
    %v733 = vsel %vm464, %v699, 0
    %v736 = vsel %vm464, %v700, 0
    %v739 = vsel %vm464, %v701, 0
    %v742 = vsel %vm464, %v702, 0
    %v745 = vsel %vm464, %v703, 0
    %v748 = vsel %vm464, %v704, 0
    %v751 = vsel %vm464, %v705, 0
    %v754 = vsel %vm464, %v706, 0
    %v757 = vsel %vm464, %v707, 0
    %759 = vmatpush.msra.mxu0 0.0
    %760 = vmatpush.msra.mxu0 0.0
    %761 = vmatpush.msra.mxu0 0.0
    %762 = vmatpush.msra.mxu0 0.0
    %763 = vmatpush.msra.mxu0 0.0
    %764 = vmatpush.msra.mxu0 0.0
    %765 = vmatpush.msra.mxu0 0.0
    %766 = vmatpush.msra.mxu0 0.0
    %767 = vmatpush.msra.mxu0 0.0
    %768 = vmatpush.msra.mxu0 0.0
    %769 = vmatpush.msra.mxu0 0.0
    %770 = vmatpush.msra.mxu0 0.0
    %771 = vmatpush.msra.mxu0 0.0
    %772 = vmatpush.msra.mxu0 0.0
    %773 = vmatpush.msra.mxu0 %v710
    %774 = vmatpush.msra.mxu0 %v709
    %775 = vmatmul.f32.gmra.mxu0 %v712
    %v776 = vpop.f32.mrf.mxu0
    %v777 = vadd.f32 0.0, %v776
    %778 = vmatmul.f32.gmra.mxu0 %v715
    %v779 = vpop.f32.mrf.mxu0
    %v780 = vadd.f32 0.0, %v779
    %781 = vmatmul.f32.gmra.mxu0 %v718
    %v782 = vpop.f32.mrf.mxu0
    %v783 = vadd.f32 0.0, %v782
    %784 = vmatmul.f32.gmra.mxu0 %v721
    %v785 = vpop.f32.mrf.mxu0
    %v786 = vadd.f32 0.0, %v785
    %787 = vmatmul.f32.gmra.mxu0 %v724
    %v788 = vpop.f32.mrf.mxu0
    %v789 = vadd.f32 0.0, %v788
    %790 = vmatmul.f32.gmra.mxu0 %v727
    %v791 = vpop.f32.mrf.mxu0
    %v792 = vadd.f32 0.0, %v791
    %793 = vmatmul.f32.gmra.mxu0 %v730
    %v794 = vpop.f32.mrf.mxu0
    %v795 = vadd.f32 0.0, %v794
    %796 = vmatmul.f32.gmra.mxu0 %v733
    %v797 = vpop.f32.mrf.mxu0
    %v798 = vadd.f32 0.0, %v797
    %799 = vmatmul.f32.gmra.mxu0 %v736
    %v800 = vpop.f32.mrf.mxu0
    %v801 = vadd.f32 0.0, %v800
    %802 = vmatmul.f32.gmra.mxu0 %v739
    %v803 = vpop.f32.mrf.mxu0
    %v804 = vadd.f32 0.0, %v803
    %805 = vmatmul.f32.gmra.mxu0 %v742
    %v806 = vpop.f32.mrf.mxu0
    %v807 = vadd.f32 0.0, %v806
    %808 = vmatmul.f32.gmra.mxu0 %v745
    %v809 = vpop.f32.mrf.mxu0
    %v810 = vadd.f32 0.0, %v809
    %811 = vmatmul.f32.gmra.mxu0 %v748
    %v812 = vpop.f32.mrf.mxu0
    %v813 = vadd.f32 0.0, %v812
    %814 = vmatmul.f32.gmra.mxu0 %v751
    %v815 = vpop.f32.mrf.mxu0
    %v816 = vadd.f32 0.0, %v815
    %817 = vmatmul.f32.gmra.mxu0 %v754
    %v818 = vpop.f32.mrf.mxu0
    %v819 = vadd.f32 0.0, %v818
    %820 = vmatmul.f32.gmra.mxu0 %v757
    %v821 = vpop.f32.mrf.mxu0
    %v822 = vadd.f32 0.0, %v821
    %823 = vdwg.mxu0
    %v824 = vadd.f32 %v644, %v777
    %v825 = vadd.f32 %v647, %v780
    %v826 = vadd.f32 %v650, %v783
    %v827 = vadd.f32 %v653, %v786
    %v828 = vadd.f32 %v656, %v789
    %v829 = vadd.f32 %v659, %v792
    %v830 = vadd.f32 %v662, %v795
    %v831 = vadd.f32 %v665, %v798
    %v832 = vadd.f32 %v668, %v801
    %v833 = vadd.f32 %v671, %v804
    %v834 = vadd.f32 %v674, %v807
    %v835 = vadd.f32 %v677, %v810
    %v836 = vadd.f32 %v680, %v813
    %v837 = vadd.f32 %v683, %v816
    %v838 = vadd.f32 %v686, %v819
    %v839 = vadd.f32 %v689, %v822
    %s840 = scalar_lea.vmem [#allocation3], 384
    %v841 = vld [vmem:[%s840] sm:$0xff]
    %v842 = vld [vmem:[%s840 + $0x8] sm:$0xff]
    %v843 = vld [vmem:[%s840 + $0x10] sm:$0xff]
    %v844 = vld [vmem:[%s840 + $0x18] sm:$0xff]
    %v845 = vld [vmem:[%s840 + $0x20] sm:$0xff]
    %v846 = vld [vmem:[%s840 + $0x28] sm:$0xff]
    %v847 = vld [vmem:[%s840 + $0x30] sm:$0xff]
    %v848 = vld [vmem:[%s840 + $0x38] sm:$0xff]
    %v849 = vld [vmem:[%s840 + $0x40] sm:$0xff]
    %v850 = vld [vmem:[%s840 + $0x48] sm:$0xff]
    %v851 = vld [vmem:[%s840 + $0x50] sm:$0xff]
    %v852 = vld [vmem:[%s840 + $0x58] sm:$0xff]
    %v853 = vld [vmem:[%s840 + $0x60] sm:$0xff]
    %v854 = vld [vmem:[%s840 + $0x68] sm:$0xff]
    %v855 = vld [vmem:[%s840 + $0x70] sm:$0xff]
    %v856 = vld [vmem:[%s840 + $0x78] sm:$0xff]
    %s857 = scalar_lea.vmem [#allocation7], 48
    %v858 = vld [vmem:[%s857] sm:$0xff]
    %v859 = vld [vmem:[%s857 + $0x8] sm:$0xff]
    %v861 = vsel %vm464, %v841, 0
    %v864 = vsel %vm464, %v842, 0
    %v867 = vsel %vm464, %v843, 0
    %v870 = vsel %vm464, %v844, 0
    %v873 = vsel %vm464, %v845, 0
    %v876 = vsel %vm464, %v846, 0
    %v879 = vsel %vm464, %v847, 0
    %v882 = vsel %vm464, %v848, 0
    %v885 = vsel %vm464, %v849, 0
    %v888 = vsel %vm464, %v850, 0
    %v891 = vsel %vm464, %v851, 0
    %v894 = vsel %vm464, %v852, 0
    %v897 = vsel %vm464, %v853, 0
    %v900 = vsel %vm464, %v854, 0
    %v903 = vsel %vm464, %v855, 0
    %v906 = vsel %vm464, %v856, 0
    %908 = vmatpush.msra.mxu0 0.0
    %909 = vmatpush.msra.mxu0 0.0
    %910 = vmatpush.msra.mxu0 0.0
    %911 = vmatpush.msra.mxu0 0.0
    %912 = vmatpush.msra.mxu0 0.0
    %913 = vmatpush.msra.mxu0 0.0
    %914 = vmatpush.msra.mxu0 0.0
    %915 = vmatpush.msra.mxu0 0.0
    %916 = vmatpush.msra.mxu0 0.0
    %917 = vmatpush.msra.mxu0 0.0
    %918 = vmatpush.msra.mxu0 0.0
    %919 = vmatpush.msra.mxu0 0.0
    %920 = vmatpush.msra.mxu0 0.0
    %921 = vmatpush.msra.mxu0 0.0
    %922 = vmatpush.msra.mxu0 %v859
    %923 = vmatpush.msra.mxu0 %v858
    %924 = vmatmul.f32.gmra.mxu0 %v861
    %v925 = vpop.f32.mrf.mxu0
    %v926 = vadd.f32 0.0, %v925
    %927 = vmatmul.f32.gmra.mxu0 %v864
    %v928 = vpop.f32.mrf.mxu0
    %v929 = vadd.f32 0.0, %v928
    %930 = vmatmul.f32.gmra.mxu0 %v867
    %v931 = vpop.f32.mrf.mxu0
    %v932 = vadd.f32 0.0, %v931
    %933 = vmatmul.f32.gmra.mxu0 %v870
    %v934 = vpop.f32.mrf.mxu0
    %v935 = vadd.f32 0.0, %v934
    %936 = vmatmul.f32.gmra.mxu0 %v873
    %v937 = vpop.f32.mrf.mxu0
    %v938 = vadd.f32 0.0, %v937
    %939 = vmatmul.f32.gmra.mxu0 %v876
    %v940 = vpop.f32.mrf.mxu0
    %v941 = vadd.f32 0.0, %v940
    %942 = vmatmul.f32.gmra.mxu0 %v879
    %v943 = vpop.f32.mrf.mxu0
    %v944 = vadd.f32 0.0, %v943
    %945 = vmatmul.f32.gmra.mxu0 %v882
    %v946 = vpop.f32.mrf.mxu0
    %v947 = vadd.f32 0.0, %v946
    %948 = vmatmul.f32.gmra.mxu0 %v885
    %v949 = vpop.f32.mrf.mxu0
    %v950 = vadd.f32 0.0, %v949
    %951 = vmatmul.f32.gmra.mxu0 %v888
    %v952 = vpop.f32.mrf.mxu0
    %v953 = vadd.f32 0.0, %v952
    %954 = vmatmul.f32.gmra.mxu0 %v891
    %v955 = vpop.f32.mrf.mxu0
    %v956 = vadd.f32 0.0, %v955
    %957 = vmatmul.f32.gmra.mxu0 %v894
    %v958 = vpop.f32.mrf.mxu0
    %v959 = vadd.f32 0.0, %v958
    %960 = vmatmul.f32.gmra.mxu0 %v897
    %v961 = vpop.f32.mrf.mxu0
    %v962 = vadd.f32 0.0, %v961
    %963 = vmatmul.f32.gmra.mxu0 %v900
    %v964 = vpop.f32.mrf.mxu0
    %v965 = vadd.f32 0.0, %v964
    %966 = vmatmul.f32.gmra.mxu0 %v903
    %v967 = vpop.f32.mrf.mxu0
    %v968 = vadd.f32 0.0, %v967
    %969 = vmatmul.f32.gmra.mxu0 %v906
    %v970 = vpop.f32.mrf.mxu0
    %v971 = vadd.f32 0.0, %v970
    %972 = vdwg.mxu0
    %v973 = vadd.f32 %v824, %v926
    %v974 = vadd.f32 %v825, %v929
    %v975 = vadd.f32 %v826, %v932
    %v976 = vadd.f32 %v827, %v935
    %v977 = vadd.f32 %v828, %v938
    %v978 = vadd.f32 %v829, %v941
    %v979 = vadd.f32 %v830, %v944
    %v980 = vadd.f32 %v831, %v947
    %v981 = vadd.f32 %v832, %v950
    %v982 = vadd.f32 %v833, %v953
    %v983 = vadd.f32 %v834, %v956
    %v984 = vadd.f32 %v835, %v959
    %v985 = vadd.f32 %v836, %v962
    %v986 = vadd.f32 %v837, %v965
    %v987 = vadd.f32 %v838, %v968
    %v988 = vadd.f32 %v839, %v971
    %s989 = scalar_lea.vmem [#allocation3], 512
    %v990 = vld [vmem:[%s989] sm:$0xff]
    %v991 = vld [vmem:[%s989 + $0x8] sm:$0xff]
    %v992 = vld [vmem:[%s989 + $0x10] sm:$0xff]
    %v993 = vld [vmem:[%s989 + $0x18] sm:$0xff]
    %v994 = vld [vmem:[%s989 + $0x20] sm:$0xff]
    %v995 = vld [vmem:[%s989 + $0x28] sm:$0xff]
    %v996 = vld [vmem:[%s989 + $0x30] sm:$0xff]
    %v997 = vld [vmem:[%s989 + $0x38] sm:$0xff]
    %v998 = vld [vmem:[%s989 + $0x40] sm:$0xff]
    %v999 = vld [vmem:[%s989 + $0x48] sm:$0xff]
    %v1000 = vld [vmem:[%s989 + $0x50] sm:$0xff]
    %v1001 = vld [vmem:[%s989 + $0x58] sm:$0xff]
    %v1002 = vld [vmem:[%s989 + $0x60] sm:$0xff]
    %v1003 = vld [vmem:[%s989 + $0x68] sm:$0xff]
    %v1004 = vld [vmem:[%s989 + $0x70] sm:$0xff]
    %v1005 = vld [vmem:[%s989 + $0x78] sm:$0xff]
    %s1006 = scalar_lea.vmem [#allocation7], 64
    %v1007 = vld [vmem:[%s1006] sm:$0xff]
    %v1008 = vld [vmem:[%s1006 + $0x8] sm:$0xff]
    %v1010 = vsel %vm464, %v990, 0
    %v1013 = vsel %vm464, %v991, 0
    %v1016 = vsel %vm464, %v992, 0
    %v1019 = vsel %vm464, %v993, 0
    %v1022 = vsel %vm464, %v994, 0
    %v1025 = vsel %vm464, %v995, 0
    %v1028 = vsel %vm464, %v996, 0
    %v1031 = vsel %vm464, %v997, 0
    %v1034 = vsel %vm464, %v998, 0
    %v1037 = vsel %vm464, %v999, 0
    %v1040 = vsel %vm464, %v1000, 0
    %v1043 = vsel %vm464, %v1001, 0
    %v1046 = vsel %vm464, %v1002, 0
    %v1049 = vsel %vm464, %v1003, 0
    %v1052 = vsel %vm464, %v1004, 0
    %v1055 = vsel %vm464, %v1005, 0
    %1057 = vmatpush.msra.mxu0 0.0
    %1058 = vmatpush.msra.mxu0 0.0
    %1059 = vmatpush.msra.mxu0 0.0
    %1060 = vmatpush.msra.mxu0 0.0
    %1061 = vmatpush.msra.mxu0 0.0
    %1062 = vmatpush.msra.mxu0 0.0
    %1063 = vmatpush.msra.mxu0 0.0
    %1064 = vmatpush.msra.mxu0 0.0
    %1065 = vmatpush.msra.mxu0 0.0
    %1066 = vmatpush.msra.mxu0 0.0
    %1067 = vmatpush.msra.mxu0 0.0
    %1068 = vmatpush.msra.mxu0 0.0
    %1069 = vmatpush.msra.mxu0 0.0
    %1070 = vmatpush.msra.mxu0 0.0
    %1071 = vmatpush.msra.mxu0 %v1008
    %1072 = vmatpush.msra.mxu0 %v1007
    %1073 = vmatmul.f32.gmra.mxu0 %v1010
    %v1074 = vpop.f32.mrf.mxu0
    %v1075 = vadd.f32 0.0, %v1074
    %1076 = vmatmul.f32.gmra.mxu0 %v1013
    %v1077 = vpop.f32.mrf.mxu0
    %v1078 = vadd.f32 0.0, %v1077
    %1079 = vmatmul.f32.gmra.mxu0 %v1016
    %v1080 = vpop.f32.mrf.mxu0
    %v1081 = vadd.f32 0.0, %v1080
    %1082 = vmatmul.f32.gmra.mxu0 %v1019
    %v1083 = vpop.f32.mrf.mxu0
    %v1084 = vadd.f32 0.0, %v1083
    %1085 = vmatmul.f32.gmra.mxu0 %v1022
    %v1086 = vpop.f32.mrf.mxu0
    %v1087 = vadd.f32 0.0, %v1086
    %1088 = vmatmul.f32.gmra.mxu0 %v1025
    %v1089 = vpop.f32.mrf.mxu0
    %v1090 = vadd.f32 0.0, %v1089
    %1091 = vmatmul.f32.gmra.mxu0 %v1028
    %v1092 = vpop.f32.mrf.mxu0
    %v1093 = vadd.f32 0.0, %v1092
    %1094 = vmatmul.f32.gmra.mxu0 %v1031
    %v1095 = vpop.f32.mrf.mxu0
    %v1096 = vadd.f32 0.0, %v1095
    %1097 = vmatmul.f32.gmra.mxu0 %v1034
    %v1098 = vpop.f32.mrf.mxu0
    %v1099 = vadd.f32 0.0, %v1098
    %1100 = vmatmul.f32.gmra.mxu0 %v1037
    %v1101 = vpop.f32.mrf.mxu0
    %v1102 = vadd.f32 0.0, %v1101
    %1103 = vmatmul.f32.gmra.mxu0 %v1040
    %v1104 = vpop.f32.mrf.mxu0
    %v1105 = vadd.f32 0.0, %v1104
    %1106 = vmatmul.f32.gmra.mxu0 %v1043
    %v1107 = vpop.f32.mrf.mxu0
    %v1108 = vadd.f32 0.0, %v1107
    %1109 = vmatmul.f32.gmra.mxu0 %v1046
    %v1110 = vpop.f32.mrf.mxu0
    %v1111 = vadd.f32 0.0, %v1110
    %1112 = vmatmul.f32.gmra.mxu0 %v1049
    %v1113 = vpop.f32.mrf.mxu0
    %v1114 = vadd.f32 0.0, %v1113
    %1115 = vmatmul.f32.gmra.mxu0 %v1052
    %v1116 = vpop.f32.mrf.mxu0
    %v1117 = vadd.f32 0.0, %v1116
    %1118 = vmatmul.f32.gmra.mxu0 %v1055
    %v1119 = vpop.f32.mrf.mxu0
    %v1120 = vadd.f32 0.0, %v1119
    %1121 = vdwg.mxu0
    %v1122 = vadd.f32 %v973, %v1075
    %v1123 = vadd.f32 %v974, %v1078
    %v1124 = vadd.f32 %v975, %v1081
    %v1125 = vadd.f32 %v976, %v1084
    %v1126 = vadd.f32 %v977, %v1087
    %v1127 = vadd.f32 %v978, %v1090
    %v1128 = vadd.f32 %v979, %v1093
    %v1129 = vadd.f32 %v980, %v1096
    %v1130 = vadd.f32 %v981, %v1099
    %v1131 = vadd.f32 %v982, %v1102
    %v1132 = vadd.f32 %v983, %v1105
    %v1133 = vadd.f32 %v984, %v1108
    %v1134 = vadd.f32 %v985, %v1111
    %v1135 = vadd.f32 %v986, %v1114
    %v1136 = vadd.f32 %v987, %v1117
    %v1137 = vadd.f32 %v988, %v1120
    %s1138 = scalar_lea.vmem [#allocation3], 640
    %v1139 = vld [vmem:[%s1138] sm:$0xff]
    %v1140 = vld [vmem:[%s1138 + $0x8] sm:$0xff]
    %v1141 = vld [vmem:[%s1138 + $0x10] sm:$0xff]
    %v1142 = vld [vmem:[%s1138 + $0x18] sm:$0xff]
    %v1143 = vld [vmem:[%s1138 + $0x20] sm:$0xff]
    %v1144 = vld [vmem:[%s1138 + $0x28] sm:$0xff]
    %v1145 = vld [vmem:[%s1138 + $0x30] sm:$0xff]
    %v1146 = vld [vmem:[%s1138 + $0x38] sm:$0xff]
    %v1147 = vld [vmem:[%s1138 + $0x40] sm:$0xff]
    %v1148 = vld [vmem:[%s1138 + $0x48] sm:$0xff]
    %v1149 = vld [vmem:[%s1138 + $0x50] sm:$0xff]
    %v1150 = vld [vmem:[%s1138 + $0x58] sm:$0xff]
    %v1151 = vld [vmem:[%s1138 + $0x60] sm:$0xff]
    %v1152 = vld [vmem:[%s1138 + $0x68] sm:$0xff]
    %v1153 = vld [vmem:[%s1138 + $0x70] sm:$0xff]
    %v1154 = vld [vmem:[%s1138 + $0x78] sm:$0xff]
    %s1155 = scalar_lea.vmem [#allocation7], 80
    %v1156 = vld [vmem:[%s1155] sm:$0xff]
    %v1157 = vld [vmem:[%s1155 + $0x8] sm:$0xff]
    %v1159 = vsel %vm464, %v1139, 0
    %v1162 = vsel %vm464, %v1140, 0
    %v1165 = vsel %vm464, %v1141, 0
    %v1168 = vsel %vm464, %v1142, 0
    %v1171 = vsel %vm464, %v1143, 0
    %v1174 = vsel %vm464, %v1144, 0
    %v1177 = vsel %vm464, %v1145, 0
    %v1180 = vsel %vm464, %v1146, 0
    %v1183 = vsel %vm464, %v1147, 0
    %v1186 = vsel %vm464, %v1148, 0
    %v1189 = vsel %vm464, %v1149, 0
    %v1192 = vsel %vm464, %v1150, 0
    %v1195 = vsel %vm464, %v1151, 0
    %v1198 = vsel %vm464, %v1152, 0
    %v1201 = vsel %vm464, %v1153, 0
    %v1204 = vsel %vm464, %v1154, 0
    %1206 = vmatpush.msra.mxu0 0.0
    %1207 = vmatpush.msra.mxu0 0.0
    %1208 = vmatpush.msra.mxu0 0.0
    %1209 = vmatpush.msra.mxu0 0.0
    %1210 = vmatpush.msra.mxu0 0.0
    %1211 = vmatpush.msra.mxu0 0.0
    %1212 = vmatpush.msra.mxu0 0.0
    %1213 = vmatpush.msra.mxu0 0.0
    %1214 = vmatpush.msra.mxu0 0.0
    %1215 = vmatpush.msra.mxu0 0.0
    %1216 = vmatpush.msra.mxu0 0.0
    %1217 = vmatpush.msra.mxu0 0.0
    %1218 = vmatpush.msra.mxu0 0.0
    %1219 = vmatpush.msra.mxu0 0.0
    %1220 = vmatpush.msra.mxu0 %v1157
    %1221 = vmatpush.msra.mxu0 %v1156
    %1222 = vmatmul.f32.gmra.mxu0 %v1159
    %v1223 = vpop.f32.mrf.mxu0
    %v1224 = vadd.f32 0.0, %v1223
    %1225 = vmatmul.f32.gmra.mxu0 %v1162
    %v1226 = vpop.f32.mrf.mxu0
    %v1227 = vadd.f32 0.0, %v1226
    %1228 = vmatmul.f32.gmra.mxu0 %v1165
    %v1229 = vpop.f32.mrf.mxu0
    %v1230 = vadd.f32 0.0, %v1229
    %1231 = vmatmul.f32.gmra.mxu0 %v1168
    %v1232 = vpop.f32.mrf.mxu0
    %v1233 = vadd.f32 0.0, %v1232
    %1234 = vmatmul.f32.gmra.mxu0 %v1171
    %v1235 = vpop.f32.mrf.mxu0
    %v1236 = vadd.f32 0.0, %v1235
    %1237 = vmatmul.f32.gmra.mxu0 %v1174
    %v1238 = vpop.f32.mrf.mxu0
    %v1239 = vadd.f32 0.0, %v1238
    %1240 = vmatmul.f32.gmra.mxu0 %v1177
    %v1241 = vpop.f32.mrf.mxu0
    %v1242 = vadd.f32 0.0, %v1241
    %1243 = vmatmul.f32.gmra.mxu0 %v1180
    %v1244 = vpop.f32.mrf.mxu0
    %v1245 = vadd.f32 0.0, %v1244
    %1246 = vmatmul.f32.gmra.mxu0 %v1183
    %v1247 = vpop.f32.mrf.mxu0
    %v1248 = vadd.f32 0.0, %v1247
    %1249 = vmatmul.f32.gmra.mxu0 %v1186
    %v1250 = vpop.f32.mrf.mxu0
    %v1251 = vadd.f32 0.0, %v1250
    %1252 = vmatmul.f32.gmra.mxu0 %v1189
    %v1253 = vpop.f32.mrf.mxu0
    %v1254 = vadd.f32 0.0, %v1253
    %1255 = vmatmul.f32.gmra.mxu0 %v1192
    %v1256 = vpop.f32.mrf.mxu0
    %v1257 = vadd.f32 0.0, %v1256
    %1258 = vmatmul.f32.gmra.mxu0 %v1195
    %v1259 = vpop.f32.mrf.mxu0
    %v1260 = vadd.f32 0.0, %v1259
    %1261 = vmatmul.f32.gmra.mxu0 %v1198
    %v1262 = vpop.f32.mrf.mxu0
    %v1263 = vadd.f32 0.0, %v1262
    %1264 = vmatmul.f32.gmra.mxu0 %v1201
    %v1265 = vpop.f32.mrf.mxu0
    %v1266 = vadd.f32 0.0, %v1265
    %1267 = vmatmul.f32.gmra.mxu0 %v1204
    %v1268 = vpop.f32.mrf.mxu0
    %v1269 = vadd.f32 0.0, %v1268
    %1270 = vdwg.mxu0
    %v1271 = vadd.f32 %v1122, %v1224
    %v1272 = vadd.f32 %v1123, %v1227
    %v1273 = vadd.f32 %v1124, %v1230
    %v1274 = vadd.f32 %v1125, %v1233
    %v1275 = vadd.f32 %v1126, %v1236
    %v1276 = vadd.f32 %v1127, %v1239
    %v1277 = vadd.f32 %v1128, %v1242
    %v1278 = vadd.f32 %v1129, %v1245
    %v1279 = vadd.f32 %v1130, %v1248
    %v1280 = vadd.f32 %v1131, %v1251
    %v1281 = vadd.f32 %v1132, %v1254
    %v1282 = vadd.f32 %v1133, %v1257
    %v1283 = vadd.f32 %v1134, %v1260
    %v1284 = vadd.f32 %v1135, %v1263
    %v1285 = vadd.f32 %v1136, %v1266
    %v1286 = vadd.f32 %v1137, %v1269
    %s1287 = scalar_lea.vmem [#allocation3], 768
    %v1288 = vld [vmem:[%s1287] sm:$0xff]
    %v1289 = vld [vmem:[%s1287 + $0x8] sm:$0xff]
    %v1290 = vld [vmem:[%s1287 + $0x10] sm:$0xff]
    %v1291 = vld [vmem:[%s1287 + $0x18] sm:$0xff]
    %v1292 = vld [vmem:[%s1287 + $0x20] sm:$0xff]
    %v1293 = vld [vmem:[%s1287 + $0x28] sm:$0xff]
    %v1294 = vld [vmem:[%s1287 + $0x30] sm:$0xff]
    %v1295 = vld [vmem:[%s1287 + $0x38] sm:$0xff]
    %v1296 = vld [vmem:[%s1287 + $0x40] sm:$0xff]
    %v1297 = vld [vmem:[%s1287 + $0x48] sm:$0xff]
    %v1298 = vld [vmem:[%s1287 + $0x50] sm:$0xff]
    %v1299 = vld [vmem:[%s1287 + $0x58] sm:$0xff]
    %v1300 = vld [vmem:[%s1287 + $0x60] sm:$0xff]
    %v1301 = vld [vmem:[%s1287 + $0x68] sm:$0xff]
    %v1302 = vld [vmem:[%s1287 + $0x70] sm:$0xff]
    %v1303 = vld [vmem:[%s1287 + $0x78] sm:$0xff]
    %s1304 = scalar_lea.vmem [#allocation7], 96
    %v1305 = vld [vmem:[%s1304] sm:$0xff]
    %v1306 = vld [vmem:[%s1304 + $0x8] sm:$0xff]
    %v1308 = vsel %vm464, %v1288, 0
    %v1311 = vsel %vm464, %v1289, 0
    %v1314 = vsel %vm464, %v1290, 0
    %v1317 = vsel %vm464, %v1291, 0
    %v1320 = vsel %vm464, %v1292, 0
    %v1323 = vsel %vm464, %v1293, 0
    %v1326 = vsel %vm464, %v1294, 0
    %v1329 = vsel %vm464, %v1295, 0
    %v1332 = vsel %vm464, %v1296, 0
    %v1335 = vsel %vm464, %v1297, 0
    %v1338 = vsel %vm464, %v1298, 0
    %v1341 = vsel %vm464, %v1299, 0
    %v1344 = vsel %vm464, %v1300, 0
    %v1347 = vsel %vm464, %v1301, 0
    %v1350 = vsel %vm464, %v1302, 0
    %v1353 = vsel %vm464, %v1303, 0
    %1355 = vmatpush.msra.mxu0 0.0
    %1356 = vmatpush.msra.mxu0 0.0
    %1357 = vmatpush.msra.mxu0 0.0
    %1358 = vmatpush.msra.mxu0 0.0
    %1359 = vmatpush.msra.mxu0 0.0
    %1360 = vmatpush.msra.mxu0 0.0
    %1361 = vmatpush.msra.mxu0 0.0
    %1362 = vmatpush.msra.mxu0 0.0
    %1363 = vmatpush.msra.mxu0 0.0
    %1364 = vmatpush.msra.mxu0 0.0
    %1365 = vmatpush.msra.mxu0 0.0
    %1366 = vmatpush.msra.mxu0 0.0
    %1367 = vmatpush.msra.mxu0 0.0
    %1368 = vmatpush.msra.mxu0 0.0
    %1369 = vmatpush.msra.mxu0 %v1306
    %1370 = vmatpush.msra.mxu0 %v1305
    %1371 = vmatmul.f32.gmra.mxu0 %v1308
    %v1372 = vpop.f32.mrf.mxu0
    %v1373 = vadd.f32 0.0, %v1372
    %1374 = vmatmul.f32.gmra.mxu0 %v1311
    %v1375 = vpop.f32.mrf.mxu0
    %v1376 = vadd.f32 0.0, %v1375
    %1377 = vmatmul.f32.gmra.mxu0 %v1314
    %v1378 = vpop.f32.mrf.mxu0
    %v1379 = vadd.f32 0.0, %v1378
    %1380 = vmatmul.f32.gmra.mxu0 %v1317
    %v1381 = vpop.f32.mrf.mxu0
    %v1382 = vadd.f32 0.0, %v1381
    %1383 = vmatmul.f32.gmra.mxu0 %v1320
    %v1384 = vpop.f32.mrf.mxu0
    %v1385 = vadd.f32 0.0, %v1384
    %1386 = vmatmul.f32.gmra.mxu0 %v1323
    %v1387 = vpop.f32.mrf.mxu0
    %v1388 = vadd.f32 0.0, %v1387
    %1389 = vmatmul.f32.gmra.mxu0 %v1326
    %v1390 = vpop.f32.mrf.mxu0
    %v1391 = vadd.f32 0.0, %v1390
    %1392 = vmatmul.f32.gmra.mxu0 %v1329
    %v1393 = vpop.f32.mrf.mxu0
    %v1394 = vadd.f32 0.0, %v1393
    %1395 = vmatmul.f32.gmra.mxu0 %v1332
    %v1396 = vpop.f32.mrf.mxu0
    %v1397 = vadd.f32 0.0, %v1396
    %1398 = vmatmul.f32.gmra.mxu0 %v1335
    %v1399 = vpop.f32.mrf.mxu0
    %v1400 = vadd.f32 0.0, %v1399
    %1401 = vmatmul.f32.gmra.mxu0 %v1338
    %v1402 = vpop.f32.mrf.mxu0
    %v1403 = vadd.f32 0.0, %v1402
    %1404 = vmatmul.f32.gmra.mxu0 %v1341
    %v1405 = vpop.f32.mrf.mxu0
    %v1406 = vadd.f32 0.0, %v1405
    %1407 = vmatmul.f32.gmra.mxu0 %v1344
    %v1408 = vpop.f32.mrf.mxu0
    %v1409 = vadd.f32 0.0, %v1408
    %1410 = vmatmul.f32.gmra.mxu0 %v1347
    %v1411 = vpop.f32.mrf.mxu0
    %v1412 = vadd.f32 0.0, %v1411
    %1413 = vmatmul.f32.gmra.mxu0 %v1350
    %v1414 = vpop.f32.mrf.mxu0
    %v1415 = vadd.f32 0.0, %v1414
    %1416 = vmatmul.f32.gmra.mxu0 %v1353
    %v1417 = vpop.f32.mrf.mxu0
    %v1418 = vadd.f32 0.0, %v1417
    %1419 = vdwg.mxu0
    %v1420 = vadd.f32 %v1271, %v1373
    %v1421 = vadd.f32 %v1272, %v1376
    %v1422 = vadd.f32 %v1273, %v1379
    %v1423 = vadd.f32 %v1274, %v1382
    %v1424 = vadd.f32 %v1275, %v1385
    %v1425 = vadd.f32 %v1276, %v1388
    %v1426 = vadd.f32 %v1277, %v1391
    %v1427 = vadd.f32 %v1278, %v1394
    %v1428 = vadd.f32 %v1279, %v1397
    %v1429 = vadd.f32 %v1280, %v1400
    %v1430 = vadd.f32 %v1281, %v1403
    %v1431 = vadd.f32 %v1282, %v1406
    %v1432 = vadd.f32 %v1283, %v1409
    %v1433 = vadd.f32 %v1284, %v1412
    %v1434 = vadd.f32 %v1285, %v1415
    %v1435 = vadd.f32 %v1286, %v1418
    %s1436 = scalar_lea.vmem [#allocation3], 896
    %v1437 = vld [vmem:[%s1436] sm:$0xff]
    %v1438 = vld [vmem:[%s1436 + $0x8] sm:$0xff]
    %v1439 = vld [vmem:[%s1436 + $0x10] sm:$0xff]
    %v1440 = vld [vmem:[%s1436 + $0x18] sm:$0xff]
    %v1441 = vld [vmem:[%s1436 + $0x20] sm:$0xff]
    %v1442 = vld [vmem:[%s1436 + $0x28] sm:$0xff]
    %v1443 = vld [vmem:[%s1436 + $0x30] sm:$0xff]
    %v1444 = vld [vmem:[%s1436 + $0x38] sm:$0xff]
    %v1445 = vld [vmem:[%s1436 + $0x40] sm:$0xff]
    %v1446 = vld [vmem:[%s1436 + $0x48] sm:$0xff]
    %v1447 = vld [vmem:[%s1436 + $0x50] sm:$0xff]
    %v1448 = vld [vmem:[%s1436 + $0x58] sm:$0xff]
    %v1449 = vld [vmem:[%s1436 + $0x60] sm:$0xff]
    %v1450 = vld [vmem:[%s1436 + $0x68] sm:$0xff]
    %v1451 = vld [vmem:[%s1436 + $0x70] sm:$0xff]
    %v1452 = vld [vmem:[%s1436 + $0x78] sm:$0xff]
    %s1453 = scalar_lea.vmem [#allocation7], 112
    %v1454 = vld [vmem:[%s1453] sm:$0xff]
    %v1455 = vld [vmem:[%s1453 + $0x8] sm:$0xff]
    %v1457 = vsel %vm464, %v1437, 0
    %v1460 = vsel %vm464, %v1438, 0
    %v1463 = vsel %vm464, %v1439, 0
    %v1466 = vsel %vm464, %v1440, 0
    %v1469 = vsel %vm464, %v1441, 0
    %v1472 = vsel %vm464, %v1442, 0
    %v1475 = vsel %vm464, %v1443, 0
    %v1478 = vsel %vm464, %v1444, 0
    %v1481 = vsel %vm464, %v1445, 0
    %v1484 = vsel %vm464, %v1446, 0
    %v1487 = vsel %vm464, %v1447, 0
    %v1490 = vsel %vm464, %v1448, 0
    %v1493 = vsel %vm464, %v1449, 0
    %v1496 = vsel %vm464, %v1450, 0
    %v1499 = vsel %vm464, %v1451, 0
    %v1502 = vsel %vm464, %v1452, 0
    %1504 = vmatpush.msra.mxu0 0.0
    %1505 = vmatpush.msra.mxu0 0.0
    %1506 = vmatpush.msra.mxu0 0.0
    %1507 = vmatpush.msra.mxu0 0.0
    %1508 = vmatpush.msra.mxu0 0.0
    %1509 = vmatpush.msra.mxu0 0.0
    %1510 = vmatpush.msra.mxu0 0.0
    %1511 = vmatpush.msra.mxu0 0.0
    %1512 = vmatpush.msra.mxu0 0.0
    %1513 = vmatpush.msra.mxu0 0.0
    %1514 = vmatpush.msra.mxu0 0.0
    %1515 = vmatpush.msra.mxu0 0.0
    %1516 = vmatpush.msra.mxu0 0.0
    %1517 = vmatpush.msra.mxu0 0.0
    %1518 = vmatpush.msra.mxu0 %v1455
    %1519 = vmatpush.msra.mxu0 %v1454
    %1520 = vmatmul.f32.gmra.mxu0 %v1457
    %v1521 = vpop.f32.mrf.mxu0
    %v1522 = vadd.f32 0.0, %v1521
    %1523 = vmatmul.f32.gmra.mxu0 %v1460
    %v1524 = vpop.f32.mrf.mxu0
    %v1525 = vadd.f32 0.0, %v1524
    %1526 = vmatmul.f32.gmra.mxu0 %v1463
    %v1527 = vpop.f32.mrf.mxu0
    %v1528 = vadd.f32 0.0, %v1527
    %1529 = vmatmul.f32.gmra.mxu0 %v1466
    %v1530 = vpop.f32.mrf.mxu0
    %v1531 = vadd.f32 0.0, %v1530
    %1532 = vmatmul.f32.gmra.mxu0 %v1469
    %v1533 = vpop.f32.mrf.mxu0
    %v1534 = vadd.f32 0.0, %v1533
    %1535 = vmatmul.f32.gmra.mxu0 %v1472
    %v1536 = vpop.f32.mrf.mxu0
    %v1537 = vadd.f32 0.0, %v1536
    %1538 = vmatmul.f32.gmra.mxu0 %v1475
    %v1539 = vpop.f32.mrf.mxu0
    %v1540 = vadd.f32 0.0, %v1539
    %1541 = vmatmul.f32.gmra.mxu0 %v1478
    %v1542 = vpop.f32.mrf.mxu0
    %v1543 = vadd.f32 0.0, %v1542
    %1544 = vmatmul.f32.gmra.mxu0 %v1481
    %v1545 = vpop.f32.mrf.mxu0
    %v1546 = vadd.f32 0.0, %v1545
    %1547 = vmatmul.f32.gmra.mxu0 %v1484
    %v1548 = vpop.f32.mrf.mxu0
    %v1549 = vadd.f32 0.0, %v1548
    %1550 = vmatmul.f32.gmra.mxu0 %v1487
    %v1551 = vpop.f32.mrf.mxu0
    %v1552 = vadd.f32 0.0, %v1551
    %1553 = vmatmul.f32.gmra.mxu0 %v1490
    %v1554 = vpop.f32.mrf.mxu0
    %v1555 = vadd.f32 0.0, %v1554
    %1556 = vmatmul.f32.gmra.mxu0 %v1493
    %v1557 = vpop.f32.mrf.mxu0
    %v1558 = vadd.f32 0.0, %v1557
    %1559 = vmatmul.f32.gmra.mxu0 %v1496
    %v1560 = vpop.f32.mrf.mxu0
    %v1561 = vadd.f32 0.0, %v1560
    %1562 = vmatmul.f32.gmra.mxu0 %v1499
    %v1563 = vpop.f32.mrf.mxu0
    %v1564 = vadd.f32 0.0, %v1563
    %1565 = vmatmul.f32.gmra.mxu0 %v1502
    %v1566 = vpop.f32.mrf.mxu0
    %v1567 = vadd.f32 0.0, %v1566
    %1568 = vdwg.mxu0
    %v1569 = vadd.f32 %v1420, %v1522
    %v1570 = vadd.f32 %v1421, %v1525
    %v1571 = vadd.f32 %v1422, %v1528
    %v1572 = vadd.f32 %v1423, %v1531
    %v1573 = vadd.f32 %v1424, %v1534
    %v1574 = vadd.f32 %v1425, %v1537
    %v1575 = vadd.f32 %v1426, %v1540
    %v1576 = vadd.f32 %v1427, %v1543
    %v1577 = vadd.f32 %v1428, %v1546
    %v1578 = vadd.f32 %v1429, %v1549
    %v1579 = vadd.f32 %v1430, %v1552
    %v1580 = vadd.f32 %v1431, %v1555
    %v1581 = vadd.f32 %v1432, %v1558
    %v1582 = vadd.f32 %v1433, %v1561
    %v1583 = vadd.f32 %v1434, %v1564
    %v1584 = vadd.f32 %v1435, %v1567
    %s1585 = scalar_lea.vmem [#allocation3], 1024
    %v1586 = vld [vmem:[%s1585] sm:$0xff]
    %v1587 = vld [vmem:[%s1585 + $0x8] sm:$0xff]
    %v1588 = vld [vmem:[%s1585 + $0x10] sm:$0xff]
    %v1589 = vld [vmem:[%s1585 + $0x18] sm:$0xff]
    %v1590 = vld [vmem:[%s1585 + $0x20] sm:$0xff]
    %v1591 = vld [vmem:[%s1585 + $0x28] sm:$0xff]
    %v1592 = vld [vmem:[%s1585 + $0x30] sm:$0xff]
    %v1593 = vld [vmem:[%s1585 + $0x38] sm:$0xff]
    %v1594 = vld [vmem:[%s1585 + $0x40] sm:$0xff]
    %v1595 = vld [vmem:[%s1585 + $0x48] sm:$0xff]
    %v1596 = vld [vmem:[%s1585 + $0x50] sm:$0xff]
    %v1597 = vld [vmem:[%s1585 + $0x58] sm:$0xff]
    %v1598 = vld [vmem:[%s1585 + $0x60] sm:$0xff]
    %v1599 = vld [vmem:[%s1585 + $0x68] sm:$0xff]
    %v1600 = vld [vmem:[%s1585 + $0x70] sm:$0xff]
    %v1601 = vld [vmem:[%s1585 + $0x78] sm:$0xff]
    %s1602 = scalar_lea.vmem [#allocation7], 128
    %v1603 = vld [vmem:[%s1602] sm:$0xff]
    %v1604 = vld [vmem:[%s1602 + $0x8] sm:$0xff]
    %v1606 = vsel %vm464, %v1586, 0
    %v1609 = vsel %vm464, %v1587, 0
    %v1612 = vsel %vm464, %v1588, 0
    %v1615 = vsel %vm464, %v1589, 0
    %v1618 = vsel %vm464, %v1590, 0
    %v1621 = vsel %vm464, %v1591, 0
    %v1624 = vsel %vm464, %v1592, 0
    %v1627 = vsel %vm464, %v1593, 0
    %v1630 = vsel %vm464, %v1594, 0
    %v1633 = vsel %vm464, %v1595, 0
    %v1636 = vsel %vm464, %v1596, 0
    %v1639 = vsel %vm464, %v1597, 0
    %v1642 = vsel %vm464, %v1598, 0
    %v1645 = vsel %vm464, %v1599, 0
    %v1648 = vsel %vm464, %v1600, 0
    %v1651 = vsel %vm464, %v1601, 0
    %1653 = vmatpush.msra.mxu0 0.0
    %1654 = vmatpush.msra.mxu0 0.0
    %1655 = vmatpush.msra.mxu0 0.0
    %1656 = vmatpush.msra.mxu0 0.0
    %1657 = vmatpush.msra.mxu0 0.0
    %1658 = vmatpush.msra.mxu0 0.0
    %1659 = vmatpush.msra.mxu0 0.0
    %1660 = vmatpush.msra.mxu0 0.0
    %1661 = vmatpush.msra.mxu0 0.0
    %1662 = vmatpush.msra.mxu0 0.0
    %1663 = vmatpush.msra.mxu0 0.0
    %1664 = vmatpush.msra.mxu0 0.0
    %1665 = vmatpush.msra.mxu0 0.0
    %1666 = vmatpush.msra.mxu0 0.0
    %1667 = vmatpush.msra.mxu0 %v1604
    %1668 = vmatpush.msra.mxu0 %v1603
    %1669 = vmatmul.f32.gmra.mxu0 %v1606
    %v1670 = vpop.f32.mrf.mxu0
    %v1671 = vadd.f32 0.0, %v1670
    %1672 = vmatmul.f32.gmra.mxu0 %v1609
    %v1673 = vpop.f32.mrf.mxu0
    %v1674 = vadd.f32 0.0, %v1673
    %1675 = vmatmul.f32.gmra.mxu0 %v1612
    %v1676 = vpop.f32.mrf.mxu0
    %v1677 = vadd.f32 0.0, %v1676
    %1678 = vmatmul.f32.gmra.mxu0 %v1615
    %v1679 = vpop.f32.mrf.mxu0
    %v1680 = vadd.f32 0.0, %v1679
    %1681 = vmatmul.f32.gmra.mxu0 %v1618
    %v1682 = vpop.f32.mrf.mxu0
    %v1683 = vadd.f32 0.0, %v1682
    %1684 = vmatmul.f32.gmra.mxu0 %v1621
    %v1685 = vpop.f32.mrf.mxu0
    %v1686 = vadd.f32 0.0, %v1685
    %1687 = vmatmul.f32.gmra.mxu0 %v1624
    %v1688 = vpop.f32.mrf.mxu0
    %v1689 = vadd.f32 0.0, %v1688
    %1690 = vmatmul.f32.gmra.mxu0 %v1627
    %v1691 = vpop.f32.mrf.mxu0
    %v1692 = vadd.f32 0.0, %v1691
    %1693 = vmatmul.f32.gmra.mxu0 %v1630
    %v1694 = vpop.f32.mrf.mxu0
    %v1695 = vadd.f32 0.0, %v1694
    %1696 = vmatmul.f32.gmra.mxu0 %v1633
    %v1697 = vpop.f32.mrf.mxu0
    %v1698 = vadd.f32 0.0, %v1697
    %1699 = vmatmul.f32.gmra.mxu0 %v1636
    %v1700 = vpop.f32.mrf.mxu0
    %v1701 = vadd.f32 0.0, %v1700
    %1702 = vmatmul.f32.gmra.mxu0 %v1639
    %v1703 = vpop.f32.mrf.mxu0
    %v1704 = vadd.f32 0.0, %v1703
    %1705 = vmatmul.f32.gmra.mxu0 %v1642
    %v1706 = vpop.f32.mrf.mxu0
    %v1707 = vadd.f32 0.0, %v1706
    %1708 = vmatmul.f32.gmra.mxu0 %v1645
    %v1709 = vpop.f32.mrf.mxu0
    %v1710 = vadd.f32 0.0, %v1709
    %1711 = vmatmul.f32.gmra.mxu0 %v1648
    %v1712 = vpop.f32.mrf.mxu0
    %v1713 = vadd.f32 0.0, %v1712
    %1714 = vmatmul.f32.gmra.mxu0 %v1651
    %v1715 = vpop.f32.mrf.mxu0
    %v1716 = vadd.f32 0.0, %v1715
    %1717 = vdwg.mxu0
    %v1718 = vadd.f32 %v1569, %v1671
    %v1719 = vadd.f32 %v1570, %v1674
    %v1720 = vadd.f32 %v1571, %v1677
    %v1721 = vadd.f32 %v1572, %v1680
    %v1722 = vadd.f32 %v1573, %v1683
    %v1723 = vadd.f32 %v1574, %v1686
    %v1724 = vadd.f32 %v1575, %v1689
    %v1725 = vadd.f32 %v1576, %v1692
    %v1726 = vadd.f32 %v1577, %v1695
    %v1727 = vadd.f32 %v1578, %v1698
    %v1728 = vadd.f32 %v1579, %v1701
    %v1729 = vadd.f32 %v1580, %v1704
    %v1730 = vadd.f32 %v1581, %v1707
    %v1731 = vadd.f32 %v1582, %v1710
    %v1732 = vadd.f32 %v1583, %v1713
    %v1733 = vadd.f32 %v1584, %v1716
    %v1734 = vld [vmem:[%s2] sm:$0x1]
    %v1736 = vperm.slane %v1734, 0
    %v1738 = vmul.f32 %v1718, %v1736
    %v1739 = vmul.f32 %v1719, %v1736
    %v1740 = vmul.f32 %v1720, %v1736
    %v1741 = vmul.f32 %v1721, %v1736
    %v1742 = vmul.f32 %v1722, %v1736
    %v1743 = vmul.f32 %v1723, %v1736
    %v1744 = vmul.f32 %v1724, %v1736
    %v1745 = vmul.f32 %v1725, %v1736
    %v1746 = vmul.f32 %v1726, %v1736
    %v1747 = vmul.f32 %v1727, %v1736
    %v1748 = vmul.f32 %v1728, %v1736
    %v1749 = vmul.f32 %v1729, %v1736
    %v1750 = vmul.f32 %v1730, %v1736
    %v1751 = vmul.f32 %v1731, %v1736
    %v1752 = vmul.f32 %v1732, %v1736
    %v1753 = vmul.f32 %v1733, %v1736
    %v1754 = vld [vmem:[%s3] sm:$0x1]
    %v1756 = vperm.slane %v1754, 0
    %v1758 = vadd.f32 %v1738, %v1756
    %v1759 = vadd.f32 %v1739, %v1756
    %v1760 = vadd.f32 %v1740, %v1756
    %v1761 = vadd.f32 %v1741, %v1756
    %v1762 = vadd.f32 %v1742, %v1756
    %v1763 = vadd.f32 %v1743, %v1756
    %v1764 = vadd.f32 %v1744, %v1756
    %v1765 = vadd.f32 %v1745, %v1756
    %v1766 = vadd.f32 %v1746, %v1756
    %v1767 = vadd.f32 %v1747, %v1756
    %v1768 = vadd.f32 %v1748, %v1756
    %v1769 = vadd.f32 %v1749, %v1756
    %v1770 = vadd.f32 %v1750, %v1756
    %v1771 = vadd.f32 %v1751, %v1756
    %v1772 = vadd.f32 %v1752, %v1756
    %v1773 = vadd.f32 %v1753, %v1756
    %v1774 = vmul.f32 %v1758, 0.1
    %v1775 = vmul.f32 %v1759, 0.1
    %v1776 = vmul.f32 %v1760, 0.1
    %v1777 = vmul.f32 %v1761, 0.1
    %v1778 = vmul.f32 %v1762, 0.1
    %v1779 = vmul.f32 %v1763, 0.1
    %v1780 = vmul.f32 %v1764, 0.1
    %v1781 = vmul.f32 %v1765, 0.1
    %v1782 = vmul.f32 %v1766, 0.1
    %v1783 = vmul.f32 %v1767, 0.1
    %v1784 = vmul.f32 %v1768, 0.1
    %v1785 = vmul.f32 %v1769, 0.1
    %v1786 = vmul.f32 %v1770, 0.1
    %v1787 = vmul.f32 %v1771, 0.1
    %v1788 = vmul.f32 %v1772, 0.1
    %v1789 = vmul.f32 %v1773, 0.1
    %v1790 = vmax.f32 %v1758, %v1774
    %v1791 = vmax.f32 %v1759, %v1775
    %v1792 = vmax.f32 %v1760, %v1776
    %v1793 = vmax.f32 %v1761, %v1777
    %v1794 = vmax.f32 %v1762, %v1778
    %v1795 = vmax.f32 %v1763, %v1779
    %v1796 = vmax.f32 %v1764, %v1780
    %v1797 = vmax.f32 %v1765, %v1781
    %v1798 = vmax.f32 %v1766, %v1782
    %v1799 = vmax.f32 %v1767, %v1783
    %v1800 = vmax.f32 %v1768, %v1784
    %v1801 = vmax.f32 %v1769, %v1785
    %v1802 = vmax.f32 %v1770, %v1786
    %v1803 = vmax.f32 %v1771, %v1787
    %v1804 = vmax.f32 %v1772, %v1788
    %v1805 = vmax.f32 %v1773, %v1789
    %vm1806 = vcmask 261120
    %1807 = vst.msk [vmem:[#allocation9] sm:$0xff] %vm1806, %v1790
    %1808 = vst.msk [vmem:[#allocation9 + $0x8] sm:$0xff] %vm1806, %v1791
    %1809 = vst.msk [vmem:[#allocation9 + $0x10] sm:$0xff] %vm1806, %v1792
    %1810 = vst.msk [vmem:[#allocation9 + $0x18] sm:$0xff] %vm1806, %v1793
    %1811 = vst.msk [vmem:[#allocation9 + $0x20] sm:$0xff] %vm1806, %v1794
    %1812 = vst.msk [vmem:[#allocation9 + $0x28] sm:$0xff] %vm1806, %v1795
    %1813 = vst.msk [vmem:[#allocation9 + $0x30] sm:$0xff] %vm1806, %v1796
    %1814 = vst.msk [vmem:[#allocation9 + $0x38] sm:$0xff] %vm1806, %v1797
    %1815 = vst.msk [vmem:[#allocation9 + $0x40] sm:$0xff] %vm1806, %v1798
    %1816 = vst.msk [vmem:[#allocation9 + $0x48] sm:$0xff] %vm1806, %v1799
    %1817 = vst.msk [vmem:[#allocation9 + $0x50] sm:$0xff] %vm1806, %v1800
    %1818 = vst.msk [vmem:[#allocation9 + $0x58] sm:$0xff] %vm1806, %v1801
    %1819 = vst.msk [vmem:[#allocation9 + $0x60] sm:$0xff] %vm1806, %v1802
    %1820 = vst.msk [vmem:[#allocation9 + $0x68] sm:$0xff] %vm1806, %v1803
    %1821 = vst.msk [vmem:[#allocation9 + $0x70] sm:$0xff] %vm1806, %v1804
    %1822 = vst.msk [vmem:[#allocation9 + $0x78] sm:$0xff] %vm1806, %v1805
    // Predicated region
    $region30: #{tpu_custom_call.1} parent=1 // pred_check
      _
    $region31: #{tpu_custom_call.1} parent=1 // pred_check_branch
      %1824 = sbr.rel (0) target = $region33
    $region32: #{tpu_custom_call.1} parent=1 // pred_region
      %1826 = vsyncadd [#allocation6], 0
      %s1827 = sshll.u32 [#allocation9], 4
      %s1828 = int_to_ptr.vmem [resolvable:$true] %s1827
      %s1829 = sshll.u32 %s4, 4
      %s1830 = int_to_ptr.hbm [resolvable:$true] %s1829
      %1835 = dma.vmem_to_hbm [thread:$0]  %s1828, 2048, %s1830, [#allocation6], 128, 128, 8
    $region33: #{tpu_custom_call.1} parent=1 // pred_fallthru
      _
    // Predicated region
    $region34: #{tpu_custom_call.1} parent=1 // pred_check
      _
    $region35: #{tpu_custom_call.1} parent=1 // pred_check_branch
      %1837 = sbr.rel (0) target = $region37
    $region36: #{tpu_custom_call.1} parent=1 // pred_region
      %1839 = dma.done [#allocation6], 2048
    $region37: #{tpu_custom_call.1} parent=1 // pred_fallthru
      _
    %1840 = vsyncpa [#allocation5], 1
    %1841 = vsyncpa [#allocation8], 1
    %1842 = vsyncpa [#allocation6], 1

</llo_original>
